<compile_context>
chip_gen: v5e
topology: v5e:2x2
jax: 0.10.0
libtpu: 0.0.40
codegen_flags: <defaults>
</compile_context>

<pallas_src>
import math
import functools

import numpy as np
import jax
import jax.numpy as jnp
from jax.experimental import pallas as pl
from jax.experimental.pallas import tpu as pltpu


# --------------------------------------------------------------------------- helpers

def _pick(dim, candidates):
    """Largest candidate tile that evenly divides `dim`, else the full dim."""
    for c in candidates:
        if dim % c == 0:
            return c
    return dim


# --------------------------------------------------------------- kernel 1: tiled matmul

def _matmul_kernel(x_ref, w_ref, o_ref, acc_ref):
    @pl.when(pl.program_id(2) == 0)
    def _():
        acc_ref[...] = jnp.zeros_like(acc_ref)

    acc_ref[...] += jnp.dot(x_ref[...], w_ref[...],
                            preferred_element_type=jnp.float32)

    @pl.when(pl.program_id(2) == pl.num_programs(2) - 1)
    def _():
        o_ref[...] = acc_ref[...].astype(o_ref.dtype)


def matmul_pallas(x, w, *, out_dtype=jnp.bfloat16):
    M, K = x.shape
    K2, N = w.shape
    assert K == K2
    tm = _pick(M, (512, 256, 128, 64, 32, 16, 8))
    tn = _pick(N, (512, 256, 128))
    tk = _pick(K, (1024, 512, 256, 128))
    grid = (M // tm, N // tn, K // tk)
    bytes_accessed = (M * K * x.dtype.itemsize + K * N * w.dtype.itemsize
                      + M * N * jnp.dtype(out_dtype).itemsize)
    return pl.pallas_call(
        _matmul_kernel,
        out_shape=jax.ShapeDtypeStruct((M, N), out_dtype),
        grid=grid,
        in_specs=[
            pl.BlockSpec((tm, tk), lambda i, j, k: (i, k)),
            pl.BlockSpec((tk, tn), lambda i, j, k: (k, j)),
        ],
        out_specs=pl.BlockSpec((tm, tn), lambda i, j, k: (i, j)),
        scratch_shapes=[pltpu.VMEM((tm, tn), jnp.float32)],
        compiler_params=pltpu.CompilerParams(
            dimension_semantics=("parallel", "parallel", "arbitrary"),
            vmem_limit_bytes=32 * 1024 * 1024),
        cost_estimate=pl.CostEstimate(
            flops=2 * M * N * K,
            transcendentals=0,
            bytes_accessed=int(bytes_accessed)),
    )(x, w)


# --------------------------------------------------------- kernel 2: flash attention

def _rotate_half(t):
    half = t.shape[-1] // 2
    return jnp.concatenate([t[:, half:], t[:, :half]], axis=-1)


def _flash_kernel(q_ref, k_ref, v_ref, gate_ref, cos_ref, sin_ref, o_ref,
                  m_ref, l_ref, acc_ref, qrot_ref, *, scale, tq, tk):
    h = pl.program_id(1)
    qi = pl.program_id(2)
    ki = pl.program_id(3)

    @pl.when(ki == 0)
    def _():
        m_ref[...] = jnp.full(m_ref.shape, -1e30, m_ref.dtype)
        l_ref[...] = jnp.zeros(l_ref.shape, l_ref.dtype)
        acc_ref[...] = jnp.zeros(acc_ref.shape, acc_ref.dtype)
        # q-side RoPE (+ softmax scale) hoisted out of the kv loop: once per q tile.
        q = q_ref[0].astype(jnp.float32)                       # (tq, hd)
        cq = cos_ref[pl.ds(qi * tq, tq), :]
        sq = sin_ref[pl.ds(qi * tq, tq), :]
        qrot_ref[...] = ((q * cq + _rotate_half(q) * sq) * scale).astype(jnp.bfloat16)

    # skip kv tiles that lie entirely above the causal diagonal
    needed = ki * tk <= qi * tq + (tq - 1)

    @pl.when(needed)
    def _():
        k = k_ref[0].astype(jnp.float32)                       # (tk, hd)
        ck = cos_ref[pl.ds(ki * tk, tk), :]
        sk = sin_ref[pl.ds(ki * tk, tk), :]
        k_rot = (k * ck + _rotate_half(k) * sk).astype(jnp.bfloat16)

        s = jax.lax.dot_general(                               # (tq, tk) f32
            qrot_ref[...], k_rot,
            dimension_numbers=(((1,), (1,)), ((), ())),
            preferred_element_type=jnp.float32)

        # causal mask synthesized in-kernel (no (S, S) mask array in HBM)
        row = qi * tq + jax.lax.broadcasted_iota(jnp.int32, (tq, tk), 0)
        col = ki * tk + jax.lax.broadcasted_iota(jnp.int32, (tq, tk), 1)
        s = jnp.where(col <= row, s, -1e30)

        # visual-adapter gate for this head: lane-select column h from the resident
        # (S, 128) per-row gate table (columns >= n_heads are 1.0 and never selected).
        g_tile = gate_ref[0, pl.ds(ki * tk, tk), :]            # (tk, 128) f32
        lane = jax.lax.broadcasted_iota(jnp.int32, g_tile.shape, 1)
        g_h = jnp.sum(jnp.where(lane == h, g_tile, 0.0), axis=-1, keepdims=True)
        v_g = (v_ref[0].astype(jnp.float32) * g_h).astype(jnp.bfloat16)

        m_prev = m_ref[...]
        m_new = jnp.maximum(m_prev, jnp.max(s, axis=-1, keepdims=True))
        alpha = jnp.exp(m_prev - m_new)
        p = jnp.exp(s - m_new)
        l_ref[...] = alpha * l_ref[...] + jnp.sum(p, axis=-1, keepdims=True)
        acc_ref[...] = alpha * acc_ref[...] + jnp.dot(
            p.astype(jnp.bfloat16), v_g, preferred_element_type=jnp.float32)
        m_ref[...] = m_new

    @pl.when(ki == pl.num_programs(3) - 1)
    def _():
        # exact division (runs once per q tile, not in the inner loop)
        o_ref[0] = (acc_ref[...] / l_ref[...]).astype(o_ref.dtype)


def flash_attn_pallas(proj3, gate_eff, cos_full, sin_signed, *, n_heads, head_dim):
    B, S, _ = proj3.shape
    H, hd = n_heads, head_dim
    D = H * hd
    scale = 1.0 / math.sqrt(hd)

    # TODO(synk): pad S up to a multiple of 128 for odd sequence lengths; v5e (4x128^2 MXU)
    #             may prefer tq=128, 256 targets the 256-wide MXUs of v6e/v7x.
    tq = _pick(S, (256, 128, 64, 32, 16, 8))
    tk = _pick(S, (128, 256, 64, 32, 16, 8))
    nq, nk = S // tq, S // tk
    grid = (B, H, nq, nk)

    def kv_idx(col_block_off):
        def idx(b, h, qi, ki):
            # clamp to the last causally-needed kv tile: skipped (fully masked) steps
            # keep the same block index, so they issue no DMA at all.
            ki_eff = jnp.minimum(ki, ((qi + 1) * tq - 1) // tk)
            return (b, ki_eff, col_block_off + h)
        return idx

    q_spec = pl.BlockSpec((1, tq, hd), lambda b, h, qi, ki: (b, qi, h))
    k_spec = pl.BlockSpec((1, tk, hd), kv_idx(H))
    v_spec = pl.BlockSpec((1, tk, hd), kv_idx(2 * H))
    g_spec = pl.BlockSpec((1, S, 128), lambda b, h, qi, ki: (b, 0, 0))   # resident per batch
    rope_spec = pl.BlockSpec((S, hd), lambda b, h, qi, ki: (0, 0))       # resident
    o_spec = pl.BlockSpec((1, tq, hd), lambda b, h, qi, ki: (b, qi, h))

    bytes_accessed = (3 * B * S * D * proj3.dtype.itemsize   # q/k/v sections of proj
                      + B * S * D * 2                        # bf16 output
                      + B * S * 128 * 4 + 2 * S * hd * 4)    # gate + RoPE tables (once)
    return pl.pallas_call(
        functools.partial(_flash_kernel, scale=scale, tq=tq, tk=tk),
        out_shape=jax.ShapeDtypeStruct((B, S, D), jnp.bfloat16),
        grid=grid,
        in_specs=[q_spec, k_spec, v_spec, g_spec, rope_spec, rope_spec],
        out_specs=o_spec,
        scratch_shapes=[
            pltpu.VMEM((tq, 1), jnp.float32),      # running max
            pltpu.VMEM((tq, 1), jnp.float32),      # running denom
            pltpu.VMEM((tq, hd), jnp.float32),     # output accumulator
            pltpu.VMEM((tq, hd), jnp.bfloat16),    # hoisted RoPE'd, pre-scaled q
        ],
        compiler_params=pltpu.CompilerParams(
            dimension_semantics=("parallel", "parallel", "parallel", "arbitrary"),
            vmem_limit_bytes=32 * 1024 * 1024),
        cost_estimate=pl.CostEstimate(
            flops=2 * B * H * S * S * hd,          # causal: ~half of dense 4*B*H*S*S*hd
            transcendentals=B * H * S * S // 2,
            bytes_accessed=int(bytes_accessed)),
    )(proj3, proj3, proj3, gate_eff, cos_full, sin_signed)


# ----------------------------------------------------------------------------- wrapper

def attention_forward(x, params, cos, sin, image_flag, *, n_heads):
    """image_flag: (B, S) bool — True at visual-token positions (module broadcasts it)."""
    B, S, D = x.shape
    H = n_heads
    hd = D // H
    assert hd % 128 == 0, "per-head column blocks require head_dim to be a multiple of 128"
    assert H <= 128, "gate table uses a single 128-wide lane block"

    # evens-then-odds permutation per head applied to Wq/Wk columns so interleaved-pair
    # RoPE becomes rotate-half on contiguous lanes; q.k^T is permutation-invariant.
    perm = np.concatenate([np.arange(0, hd, 2), np.arange(1, hd, 2)])
    full_perm = np.concatenate([h * hd + perm for h in range(H)])

    wq_p = params["wq"].T[:, full_perm]                       # (D, D)
    wk_p = params["wk"].T[:, full_perm]
    wv_t = params["wv"].T
    g_pad = 128                                               # lane-dense gate section
    wg_pad = jnp.pad(params["wg"].T, ((0, 0), (0, g_pad - H)))
    w_all = jnp.concatenate([wq_p, wk_p, wv_t, wg_pad], axis=1).astype(jnp.bfloat16)

    # lane-dense RoPE tables (kept f32; VMEM-resident inside the flash kernel)
    cos_full = jnp.concatenate([cos, cos], axis=-1).astype(jnp.float32)     # (S, hd)
    sin_signed = jnp.concatenate([-sin, sin], axis=-1).astype(jnp.float32)  # (S, hd)

    # 1) fused projection  x -> [xq_perm | xk_perm | xv | gate]   (bf16 in/out)
    x2 = x.reshape(B * S, D).astype(jnp.bfloat16)
    proj = matmul_pallas(x2, w_all, out_dtype=jnp.bfloat16)   # (B*S, 3D+128)

    # 2) tiny per-row effective gate table: tanh(gate) at image rows, 1.0 elsewhere
    xg = proj[:, 3 * D:3 * D + H].astype(jnp.float32)         # (B*S, H)
    g_eff = jnp.where(image_flag.reshape(B * S, 1), jnp.tanh(xg), 1.0)
    gate_eff = jnp.pad(g_eff, ((0, 0), (0, 128 - H)),
                       constant_values=1.0).reshape(B, S, 128)

    # 3) flash attention, reading q/k/v straight out of the projection buffer,
    #    gate fused into the v path, causal mask generated in-kernel
    proj3 = proj.reshape(B, S, 3 * D + g_pad)
    attn = flash_attn_pallas(proj3, gate_eff, cos_full, sin_signed,
                             n_heads=H, head_dim=hd)          # (B, S, D) bf16

    # 4) output projection (f32 result, matching the f32 input dtype of the module)
    wo_t = params["wo"].T.astype(jnp.bfloat16)
    out = matmul_pallas(attn.reshape(B * S, D), wo_t, out_dtype=jnp.float32)
    return out.reshape(B, S, D)


# --------------------------------------------------------------------- pure-JAX reference

def attention_reference(x, params, cos, sin, mask, image_position, *, n_heads):
    B, S, D = x.shape
    H = n_heads
    hd = D // H

    xq = (x @ params["wq"].T).reshape(B, S, H, hd)
    xk = (x @ params["wk"].T).reshape(B, S, H, hd)
    xv = (x @ params["wv"].T).reshape(B, S, H, hd)
    xg = jnp.tanh(x @ params["wg"].T).reshape(B, S, H, 1)
    ip = image_position.reshape(B, S, H, hd)
    xv = jnp.where(ip, xv * xg, xv)

    def rope(t):
        t2 = t.reshape(B, S, H, hd // 2, 2)
        te, to = t2[..., 0], t2[..., 1]
        c = cos[None, :, None, :]
        s = sin[None, :, None, :]
        oe = te * c - to * s
        oo = te * s + to * c
        return jnp.stack([oe, oo], axis=-1).reshape(B, S, H, hd)

    xq, xk = rope(xq), rope(xk)
    q = xq.transpose(0, 2, 1, 3)
    k = xk.transpose(0, 2, 1, 3)
    v = xv.transpose(0, 2, 1, 3)

    scores = jnp.einsum("bhqd,bhkd->bhqk", q, k) / math.sqrt(hd) + mask
    scores = jax.nn.softmax(scores.astype(jnp.float32), axis=-1)
    out = jnp.einsum("bhqk,bhkd->bhqd", scores, v)
    out = out.transpose(0, 2, 1, 3).reshape(B, S, D)
    return out @ params["wo"].T


# ----------------------------------------------------------------------------- setup

def precompute_freqs(head_dim, seqlen, theta=10000.0):
    freqs = 1.0 / (theta ** (np.arange(0, head_dim, 2, dtype=np.float32) / head_dim))
    t = np.arange(seqlen, dtype=np.float32)
    ang = np.outer(t, freqs)                        # (S, hd//2)
    return jnp.asarray(np.cos(ang)), jnp.asarray(np.sin(ang))


def init_params(key, dim, n_heads):
    k1, k2, k3, k4, k5 = jax.random.split(key, 5)
    s = 0.02
    return dict(
        wq=jax.random.normal(k1, (dim, dim), jnp.float32) * s,
        wk=jax.random.normal(k2, (dim, dim), jnp.float32) * s,
        wv=jax.random.normal(k3, (dim, dim), jnp.float32) * s,
        wo=jax.random.normal(k4, (dim, dim), jnp.float32) * s,
        # module zero-inits the gate; use small nonzero values so the gate path is exercised
        wg=jax.random.normal(k5, (n_heads, dim), jnp.float32) * s,
    )


if __name__ == "__main__":
    # shapes chosen to exercise multiple q tiles, kv tiles, causal tile-skipping and
    # multiple heads/batches, while staying small
    B, S, D, H = 2, 512, 256, 2
    hd = D // H                                     # 128

    key = jax.random.PRNGKey(0)
    kx, kp = jax.random.split(key)
    x = jax.random.normal(kx, (B, S, D), jnp.float32)
    params = init_params(kp, D, H)

    cos, sin = precompute_freqs(hd, S)
    # first 16 sequence positions are "image" tokens
    image_flag = jnp.broadcast_to((jnp.arange(S) < 16)[None, :], (B, S))

    out = attention_forward(x, params, cos, sin, image_flag, n_heads=H)
    out = jax.block_until_ready(out)

    # reference uses the explicit additive causal mask + full broadcast image_position,
    # exactly as the torch module is invoked
    mask = jnp.where(jnp.arange(S)[:, None] >= jnp.arange(S)[None, :],
                     0.0, -1e9).astype(jnp.float32)
    image_position = jnp.broadcast_to(image_flag[:, :, None], (B, S, D))
    ref = attention_reference(x, params, cos, sin, mask, image_position, n_heads=H)

    assert out.shape == (B, S, D)
    err = float(jnp.max(jnp.abs(out - ref)))
    assert err < 2e-2, f"mismatch vs reference: {err}"

    print("KERNEL_OK")
</pallas_src>

<mosaic_0001>
module attributes {stable_mosaic.version = 11 : i64} {
  func.func @_matmul_kernel(%arg0: i32, %arg1: i32, %arg2: i32, %arg3: memref<512x256xbf16, #tpu.memory_space<vmem>>, %arg4: memref<256x128xbf16, #tpu.memory_space<vmem>>, %arg5: memref<512x128xbf16, #tpu.memory_space<vmem>>, %arg6: memref<512x128xf32, #tpu.memory_space<vmem>>) attributes {dimension_semantics = [#tpu.dimension_semantics<parallel>, #tpu.dimension_semantics<parallel>, #tpu.dimension_semantics<arbitrary>], iteration_bounds = array<i64: 2, 7, 1>, scalar_prefetch = 0 : i64, scratch_operands = 1 : i64, tpu.core_type = #tpu.core_type<tc>, window_params = [{transform_indices = @transform_0, window_bounds = array<i64: 512, 256>}, {transform_indices = @transform_1, window_bounds = array<i64: 256, 128>}, {transform_indices = @transform_2, window_bounds = array<i64: 512, 128>}]} {
    %c0_i32 = arith.constant 0 : i32
    %0 = arith.cmpi eq, %arg2, %c0_i32 : i32
    %1 = arith.extui %0 : i1 to i32
    %c0_i32_0 = arith.constant 0 : i32
    %2 = arith.cmpi ne, %1, %c0_i32_0 : i32
    scf.if %2 {
      %cst_10 = arith.constant 0.000000e+00 : f32
      %12 = vector.broadcast %cst_10 : f32 to vector<512x128xf32>
      %c0_11 = arith.constant 0 : index
      %c0_12 = arith.constant 0 : index
      %13 = vector.load %arg6[%c0_11, %c0_12] : memref<512x128xf32, #tpu.memory_space<vmem>>, vector<512x128xf32>
      tpu.vector_store %arg6[%c0_11, %c0_12], %12 {strides = array<i32>} : memref<512x128xf32, #tpu.memory_space<vmem>>, vector<512x128xf32>,
    } else {
    }
    %c0 = arith.constant 0 : index
    %c0_1 = arith.constant 0 : index
    %3 = vector.load %arg6[%c0, %c0_1] : memref<512x128xf32, #tpu.memory_space<vmem>>, vector<512x128xf32>
    %c0_2 = arith.constant 0 : index
    %c0_3 = arith.constant 0 : index
    %4 = vector.load %arg3[%c0_2, %c0_3] : memref<512x256xbf16, #tpu.memory_space<vmem>>, vector<512x256xbf16>
    %c0_4 = arith.constant 0 : index
    %c0_5 = arith.constant 0 : index
    %5 = vector.load %arg4[%c0_4, %c0_5] : memref<256x128xbf16, #tpu.memory_space<vmem>>, vector<256x128xbf16>
    %cst = arith.constant dense<0.000000e+00> : vector<512x128xf32>
    %6 = tpu.matmul %4, %5, %cst {dimension_numbers = #tpu.dot_dimension_numbers<[1], [0], [0], [1], [0, 0, 1, 1], [], []>} : vector<512x256xbf16>, vector<256x128xbf16>, vector<512x128xf32> -> vector<512x128xf32>
    %7 = arith.addf %3, %6 : vector<512x128xf32>
    %c0_6 = arith.constant 0 : index
    %c0_7 = arith.constant 0 : index
    %8 = vector.load %arg6[%c0_6, %c0_7] : memref<512x128xf32, #tpu.memory_space<vmem>>, vector<512x128xf32>
    tpu.vector_store %arg6[%c0_6, %c0_7], %7 {strides = array<i32>} : memref<512x128xf32, #tpu.memory_space<vmem>>, vector<512x128xf32>,
    %c0_i32_8 = arith.constant 0 : i32
    %9 = arith.cmpi eq, %arg2, %c0_i32_8 : i32
    %10 = arith.extui %9 : i1 to i32
    %c0_i32_9 = arith.constant 0 : i32
    %11 = arith.cmpi ne, %10, %c0_i32_9 : i32
    scf.if %11 {
      %c0_10 = arith.constant 0 : index
      %c0_11 = arith.constant 0 : index
      %12 = vector.load %arg6[%c0_10, %c0_11] : memref<512x128xf32, #tpu.memory_space<vmem>>, vector<512x128xf32>
      %13 = arith.truncf %12 : vector<512x128xf32> to vector<512x128xbf16>
      %c0_12 = arith.constant 0 : index
      %c0_13 = arith.constant 0 : index
      %14 = vector.load %arg5[%c0_12, %c0_13] : memref<512x128xbf16, #tpu.memory_space<vmem>>, vector<512x128xbf16>
      tpu.vector_store %arg5[%c0_12, %c0_13], %13 {strides = array<i32>} : memref<512x128xbf16, #tpu.memory_space<vmem>>, vector<512x128xbf16>,
    } else {
    }
    return
  }
  func.func @transform_0(%arg0: i32, %arg1: i32, %arg2: i32) -> (i32, i32) {
    %c0_i32 = arith.constant 0 : i32
    return %arg0, %arg2 : i32, i32
  }
  func.func @transform_1(%arg0: i32, %arg1: i32, %arg2: i32) -> (i32, i32) {
    %c0_i32 = arith.constant 0 : i32
    return %arg2, %arg1 : i32, i32
  }
  func.func @transform_2(%arg0: i32, %arg1: i32, %arg2: i32) -> (i32, i32) {
    %c0_i32 = arith.constant 0 : i32
    return %arg0, %arg1 : i32, i32
  }
}

</mosaic_0001>

<llo_original>
// kernel: tpu_custom_call.1
$region0: #{tpu_custom_call.1}
  #allocation0 [shape = 'u32[]', space=smem, size = 0x4, offset = 0x4, fixed_abs, tag = 'smem constant byte address 0x4 - core index']
  #allocation1 [shape = 'u32[72,128]{1,0:T(1,128)}', space=vmem, size = 0x9000, scoped, tag = 'internal scratch']
  #allocation2 [shape = 'f32[512,128]{1,0:T(8,128)}', space=vmem, size = 0x40000, scoped, tag = 'scratch operand']
  %s0 = inlined_call_operand.hbm [shape: bf16[1024,256], index: 0, kind: input, shape index: {}]
  %s1 = inlined_call_operand.hbm [shape: bf16[256,896], index: 1, kind: input, shape index: {}]
  %s2 = inlined_call_operand.hbm [shape: bf16[1024,896], index: 2, kind: output, shape index: {}]
  %s3 = sld [smem:[#allocation0]]
  $region57: #{tpu_custom_call.1} parent=0
    _
  %s5 = ssub.s32 1, %s3
  %s6 = scalar_select 0, %s5, %s3
  $region1: #{tpu_custom_call.1} parent=0
    #allocation3 [shape = 'u8[524288]{0}', space=vmem, size = 0x80000, scoped, tag = 'input window, operand 0']
    #allocation4 [shape = 's32[2]{0}', space=sflag, size = 0x8, scoped, tag = 'scoped memory for tpu_custom_call.1']
    #allocation5 [shape = 's32[2]{0}', space=sflag, size = 0x8, scoped, tag = 'scoped memory for tpu_custom_call.1']
    #allocation6 [shape = 'u8[131072]{0}', space=vmem, size = 0x20000, scoped, tag = 'input window, operand 1']
    #allocation7 [shape = 's32[2]{0}', space=sflag, size = 0x8, scoped, tag = 'scoped memory for tpu_custom_call.1']
    #allocation8 [shape = 'u8[262144]{0}', space=vmem, size = 0x40000, scoped, tag = 'output window, operand 0']
    %7 = vsyncpa [#allocation4], 0
    %s8 = scalar_lea.sflag [#allocation4], 1
    %9 = vsyncpa %s8, 0
    %10 = vsyncpa [#allocation7], 0
    %s11 = scalar_lea.sflag [#allocation7], 1
    %12 = vsyncpa %s11, 0
    %13 = vsyncpa [#allocation5], 0
    %s14 = scalar_lea.sflag [#allocation5], 1
    %15 = vsyncpa %s14, 0
    loop: start=0, step=1, limit=16
    $region2: #{tpu_custom_call.1} parent=1 // loop_pre_header
      _
    $region3: #{tpu_custom_call.1} parent=1 // loop_header
      %s17 = sphi 0, %s21
      %p18 = scmp.ge.s32.totalorder %s17, 16
      %s24 = sphi 0, %s43
      %s25 = sphi 0, %s39
      %s26 = sphi 0, %s35
      %s27 = sphi 0, %s24
      %s28 = sphi 0, %s25
      %s29 = sphi 0, %s26
      %s30 = sphi 0, %s27
      %s31 = sphi 0, %s28
      %s32 = sphi 0, %s29
      %s48 = sphi 0, %s50
      %s51 = sphi 0, %s48
      %s52 = sphi 0, %s51
      %s68 = sphi 0, %s52
      %s76 = sphi 0, %s78
      %s79 = sphi 0, %s76
      %s80 = sphi 0, %s79
      %s96 = sphi 0, %s80
      %s104 = sphi 0, %s106
      %s107 = sphi 0, %s104
      %s108 = sphi 0, %s107
      %s124 = sphi 0, %s108
    $region4: #{tpu_custom_call.1} parent=1 // loop_header_branch
      %20 = sbr.rel (%p18) target = $region8
    $region5: #{tpu_custom_call.1} parent=1 // loop_body
      %s22 = ssub.s32 %s17, 1
      %s23 = ssub.s32 %s17, 2
      %s33 = sadd.s32 1, %s26
      %p34 = scmp.ge.s32.totalorder %s33, 1
      %s35 = scalar_select %p34, 0, %s33
      %s36 = sadd.s32 1, %s25
      %s37 = scalar_select %p34, %s36, %s25
      %p38 = scmp.ge.s32.totalorder %s37, 7
      %s39 = scalar_select %p38, 0, %s37
      %s40 = sadd.s32 1, %s24
      %s41 = scalar_select %p38, %s40, %s24
      %p42 = scmp.ge.s32.totalorder %s41, 2
      %s43 = scalar_select %p42, 0, %s41
      %s44 = ssub.s32 %s24, %s43
      %s45 = ssub.s32 %s26, %s35
      %s46 = sor.u32 %s44, %s45
      %p47 = scmp.eq.s32.totalorder %s46, 0
      %s49 = sadd.s32 %s48, 1
      %s50 = scalar_select %p47, %s48, %s49
      %p53 = pneg %p47
      %p54 = scmp.eq.s32.totalorder %s17, 13
      %p55 = por %p53, %p54
      %p56 = scmp.ne.s32.totalorder %s48, %s51
      %p57 = scmp.eq.s32.totalorder %s17, 0
      %p58 = por %p56, %p57
      %p59 = scmp.ne.s32.totalorder %s48, %s51
      %p60 = scmp.eq.s32.totalorder %s22, 13
      %p61 = por %p59, %p60
      %p62 = scmp.ne.s32.totalorder %s51, %s52
      %p63 = scmp.eq.s32.totalorder %s22, 0
      %p64 = por %p62, %p63
      %p65 = scmp.ne.s32.totalorder %s51, %s52
      %p66 = scmp.eq.s32.totalorder %s23, 13
      %p67 = por %p65, %p66
      %p69 = scmp.ne.s32.totalorder %s52, %s68
      %p70 = scmp.eq.s32.totalorder %s23, 0
      %p71 = por %p69, %p70
      %s72 = ssub.s32 %s26, %s35
      %s73 = ssub.s32 %s25, %s39
      %s74 = sor.u32 %s72, %s73
      %p75 = scmp.eq.s32.totalorder %s74, 0
      %s77 = sadd.s32 %s76, 1
      %s78 = scalar_select %p75, %s76, %s77
      %p81 = pneg %p75
      %p82 = scmp.eq.s32.totalorder %s17, 13
      %p83 = por %p81, %p82
      %p84 = scmp.ne.s32.totalorder %s76, %s79
      %p85 = scmp.eq.s32.totalorder %s17, 0
      %p86 = por %p84, %p85
      %p87 = scmp.ne.s32.totalorder %s76, %s79
      %p88 = scmp.eq.s32.totalorder %s22, 13
      %p89 = por %p87, %p88
      %p90 = scmp.ne.s32.totalorder %s79, %s80
      %p91 = scmp.eq.s32.totalorder %s22, 0
      %p92 = por %p90, %p91
      %p93 = scmp.ne.s32.totalorder %s79, %s80
      %p94 = scmp.eq.s32.totalorder %s23, 13
      %p95 = por %p93, %p94
      %p97 = scmp.ne.s32.totalorder %s80, %s96
      %p98 = scmp.eq.s32.totalorder %s23, 0
      %p99 = por %p97, %p98
      %s100 = ssub.s32 %s24, %s43
      %s101 = ssub.s32 %s25, %s39
      %s102 = sor.u32 %s100, %s101
      %p103 = scmp.eq.s32.totalorder %s102, 0
      %s105 = sadd.s32 %s104, 1
      %s106 = scalar_select %p103, %s104, %s105
      %p109 = pneg %p103
      %p110 = scmp.eq.s32.totalorder %s17, 13
      %p111 = por %p109, %p110
      %p112 = scmp.ne.s32.totalorder %s104, %s107
      %p113 = scmp.eq.s32.totalorder %s17, 0
      %p114 = por %p112, %p113
      %p115 = scmp.ne.s32.totalorder %s104, %s107
      %p116 = scmp.eq.s32.totalorder %s22, 13
      %p117 = por %p115, %p116
      %p118 = scmp.ne.s32.totalorder %s107, %s108
      %p119 = scmp.eq.s32.totalorder %s22, 0
      %p120 = por %p118, %p119
      %p121 = scmp.ne.s32.totalorder %s107, %s108
      %p122 = scmp.eq.s32.totalorder %s23, 13
      %p123 = por %p121, %p122
      %p125 = scmp.ne.s32.totalorder %s108, %s124
      %p126 = scmp.eq.s32.totalorder %s23, 0
      %p127 = por %p125, %p126
      %p128 = scmp.le.s32.totalorder 1, %s17
      %p129 = scmp.lt.s32.totalorder %s17, 15
      %p130 = pnand %p128, %p129
      %p131 = pneg %p130
      // Predicated region
      $region9: #{tpu_custom_call.1} parent=5 // pred_check
        _
      $region10: #{tpu_custom_call.1} parent=5 // pred_check_branch
        %133 = sbr.rel (%p130) target = $region12
      $region11: #{tpu_custom_call.1} parent=5 // pred_region
        %s134 = ssub.s32 %s17, 1
      $region12: #{tpu_custom_call.1} parent=5 // pred_fallthru
        _
      %p135 = scmp.lt.s32.totalorder %s17, 14
      // Predicated region
      $region13: #{tpu_custom_call.1} parent=5 // pred_check
        %p136 = pneg %p135
      $region14: #{tpu_custom_call.1} parent=5 // pred_check_branch
        %138 = sbr.rel (%p136) target = $region16
      $region15: #{tpu_custom_call.1} parent=5 // pred_region
        // Predicated region
        $region17: #{tpu_custom_call.1} parent=15 // pred_check
          %p139 = pneg %p58
        $region18: #{tpu_custom_call.1} parent=15 // pred_check_branch
          %141 = sbr.rel (%p139) target = $region20
        $region19: #{tpu_custom_call.1} parent=15 // pred_region
          %s142 = sand.u32 %s48, 1
          %s143 = scalar_lea.sflag [#allocation4], %s142
          %s144 = sand.u32 %s48, 1
          %s145 = smul.addr %s144, 512
          %s146 = scalar_lea.vmem [#allocation3], %s145
          %s147 = smul.u32 64, %s24
          %s148 = smul.u32 2, %s26
          %150 = vsyncadd %s143, 0
          %s151 = smul.addr %s147, 2
          %s152 = sadd.s32 %s148, %s151
          %s153 = smul.addr %s152, 4
          %s154 = scalar_lea.hbm %s0, %s153
          %s155 = sshll.u32 %s154, 4
          %s156 = int_to_ptr.hbm [resolvable:$true] %s155
          %s157 = sshll.u32 %s146, 4
          %s158 = int_to_ptr.vmem [resolvable:$true] %s157
          %163 = dma.hbm_to_vmem [thread:$0]  %s156, 8192, %s158, %s143, 128, 128, 8
        $region20: #{tpu_custom_call.1} parent=15 // pred_fallthru
          _
        // Predicated region
        $region21: #{tpu_custom_call.1} parent=15 // pred_check
          %p164 = pneg %p86
        $region22: #{tpu_custom_call.1} parent=15 // pred_check_branch
          %166 = sbr.rel (%p164) target = $region24
        $region23: #{tpu_custom_call.1} parent=15 // pred_region
          %s167 = sand.u32 %s76, 1
          %s168 = scalar_lea.sflag [#allocation7], %s167
          %s169 = sand.u32 %s76, 1
          %s170 = smul.addr %s169, 128
          %s171 = scalar_lea.vmem [#allocation6], %s170
          %s172 = smul.u32 32, %s26
          %174 = vsyncadd %s168, 0
          %s175 = smul.addr %s172, 7
          %s176 = sadd.s32 %s25, %s175
          %s177 = smul.addr %s176, 4
          %s178 = scalar_lea.hbm %s1, %s177
          %s179 = sshll.u32 %s178, 4
          %s180 = int_to_ptr.hbm [resolvable:$true] %s179
          %s181 = sshll.u32 %s171, 4
          %s182 = int_to_ptr.vmem [resolvable:$true] %s181
          %187 = dma.hbm_to_vmem [thread:$0]  %s180, 2048, %s182, %s168, 448, 64, 4
        $region24: #{tpu_custom_call.1} parent=15 // pred_fallthru
          _
      $region16: #{tpu_custom_call.1} parent=5 // pred_fallthru
        _
      %p188 = scmp.le.s32.totalorder 1, %s17
      %p189 = scmp.lt.s32.totalorder %s17, 15
      %p190 = pnand %p188, %p189
      %p191 = pneg %p190
      // Predicated region
      $region25: #{tpu_custom_call.1} parent=5 // pred_check
        _
      $region26: #{tpu_custom_call.1} parent=5 // pred_check_branch
        %193 = sbr.rel (%p190) target = $region28
      $region27: #{tpu_custom_call.1} parent=5 // pred_region
        %s194 = ssub.s32 %s17, 1
        %s195 = sand.u32 %s51, 1
        %s196 = scalar_lea.sflag [#allocation4], %s195
        %s197 = sand.u32 %s51, 1
        %s198 = smul.addr %s197, 512
        %s199 = scalar_lea.vmem [#allocation3], %s198
        // Predicated region
        $region29: #{tpu_custom_call.1} parent=27 // pred_check
          %p200 = pneg %p64
        $region30: #{tpu_custom_call.1} parent=27 // pred_check_branch
          %202 = sbr.rel (%p200) target = $region32
        $region31: #{tpu_custom_call.1} parent=27 // pred_region
          %204 = dma.done %s196, 8192
        $region32: #{tpu_custom_call.1} parent=27 // pred_fallthru
          _
        %s205 = sand.u32 %s79, 1
        %s206 = scalar_lea.sflag [#allocation7], %s205
        %s207 = sand.u32 %s79, 1
        %s208 = smul.addr %s207, 128
        %s209 = scalar_lea.vmem [#allocation6], %s208
        // Predicated region
        $region33: #{tpu_custom_call.1} parent=27 // pred_check
          %p210 = pneg %p92
        $region34: #{tpu_custom_call.1} parent=27 // pred_check_branch
          %212 = sbr.rel (%p210) target = $region36
        $region35: #{tpu_custom_call.1} parent=27 // pred_region
          %214 = dma.done %s206, 2048
        $region36: #{tpu_custom_call.1} parent=27 // pred_fallthru
          _
        %s215 = sand.u32 %s51, 1
        %s216 = scalar_lea.sflag [#allocation4], %s215
        %s217 = sand.u32 %s51, 1
        %s218 = smul.addr %s217, 512
        %s219 = scalar_lea.vmem [#allocation3], %s218
        %p220 = pneg %p64
        %p221 = pneg %p61
        %s222 = sand.u32 %s79, 1
        %s223 = scalar_lea.sflag [#allocation7], %s222
        %s224 = sand.u32 %s79, 1
        %s225 = smul.addr %s224, 128
        %s226 = scalar_lea.vmem [#allocation6], %s225
        %p227 = pneg %p92
        %p228 = pneg %p89
        %p229 = pneg %p120
        %p230 = pneg %p117
        %s231 = sand.u32 %s107, 1
        %s232 = scalar_lea.sflag [#allocation5], %s231
        %s233 = sand.u32 %s107, 1
        %s234 = smul.addr %s233, 256
        %s235 = scalar_lea.vmem [#allocation8], %s234
        %s236 = smul.u32 64, %s27
        %s237 = smul.u32 2, %s29
        %s238 = smul.u32 32, %s29
        %s239 = smul.u32 64, %s27
        %p240 = scmp.eq.s32.totalorder %s29, 0
        // Predicated region
        $region37: #{tpu_custom_call.1} parent=27 // pred_check
          %p241 = pneg %p240
        $region38: #{tpu_custom_call.1} parent=27 // pred_check_branch
          %243 = sbr.rel (%p241) target = $region40
        $region39: #{tpu_custom_call.1} parent=27 // pred_region
          %244 = vst [vmem:[#allocation2] sm:$0xff] 0.0
          %245 = vst [vmem:[#allocation2 + $0x8] sm:$0xff] 0.0
          %246 = vst [vmem:[#allocation2 + $0x10] sm:$0xff] 0.0
          %247 = vst [vmem:[#allocation2 + $0x18] sm:$0xff] 0.0
          %248 = vst [vmem:[#allocation2 + $0x20] sm:$0xff] 0.0
          %249 = vst [vmem:[#allocation2 + $0x28] sm:$0xff] 0.0
          %250 = vst [vmem:[#allocation2 + $0x30] sm:$0xff] 0.0
          %251 = vst [vmem:[#allocation2 + $0x38] sm:$0xff] 0.0
          %252 = vst [vmem:[#allocation2 + $0x40] sm:$0xff] 0.0
          %253 = vst [vmem:[#allocation2 + $0x48] sm:$0xff] 0.0
          %254 = vst [vmem:[#allocation2 + $0x50] sm:$0xff] 0.0
          %255 = vst [vmem:[#allocation2 + $0x58] sm:$0xff] 0.0
          %256 = vst [vmem:[#allocation2 + $0x60] sm:$0xff] 0.0
          %257 = vst [vmem:[#allocation2 + $0x68] sm:$0xff] 0.0
          %258 = vst [vmem:[#allocation2 + $0x70] sm:$0xff] 0.0
          %259 = vst [vmem:[#allocation2 + $0x78] sm:$0xff] 0.0
          %260 = vst [vmem:[#allocation2 + $0x80] sm:$0xff] 0.0
          %261 = vst [vmem:[#allocation2 + $0x88] sm:$0xff] 0.0
          %262 = vst [vmem:[#allocation2 + $0x90] sm:$0xff] 0.0
          %263 = vst [vmem:[#allocation2 + $0x98] sm:$0xff] 0.0
          %264 = vst [vmem:[#allocation2 + $0xa0] sm:$0xff] 0.0
          %265 = vst [vmem:[#allocation2 + $0xa8] sm:$0xff] 0.0
          %266 = vst [vmem:[#allocation2 + $0xb0] sm:$0xff] 0.0
          %267 = vst [vmem:[#allocation2 + $0xb8] sm:$0xff] 0.0
          %268 = vst [vmem:[#allocation2 + $0xc0] sm:$0xff] 0.0
          %269 = vst [vmem:[#allocation2 + $0xc8] sm:$0xff] 0.0
          %270 = vst [vmem:[#allocation2 + $0xd0] sm:$0xff] 0.0
          %271 = vst [vmem:[#allocation2 + $0xd8] sm:$0xff] 0.0
          %272 = vst [vmem:[#allocation2 + $0xe0] sm:$0xff] 0.0
          %273 = vst [vmem:[#allocation2 + $0xe8] sm:$0xff] 0.0
          %274 = vst [vmem:[#allocation2 + $0xf0] sm:$0xff] 0.0
          %275 = vst [vmem:[#allocation2 + $0xf8] sm:$0xff] 0.0
          %276 = vst [vmem:[#allocation2 + $0x100] sm:$0xff] 0.0
          %277 = vst [vmem:[#allocation2 + $0x108] sm:$0xff] 0.0
          %278 = vst [vmem:[#allocation2 + $0x110] sm:$0xff] 0.0
          %279 = vst [vmem:[#allocation2 + $0x118] sm:$0xff] 0.0
          %280 = vst [vmem:[#allocation2 + $0x120] sm:$0xff] 0.0
          %281 = vst [vmem:[#allocation2 + $0x128] sm:$0xff] 0.0
          %282 = vst [vmem:[#allocation2 + $0x130] sm:$0xff] 0.0
          %283 = vst [vmem:[#allocation2 + $0x138] sm:$0xff] 0.0
          %284 = vst [vmem:[#allocation2 + $0x140] sm:$0xff] 0.0
          %285 = vst [vmem:[#allocation2 + $0x148] sm:$0xff] 0.0
          %286 = vst [vmem:[#allocation2 + $0x150] sm:$0xff] 0.0
          %287 = vst [vmem:[#allocation2 + $0x158] sm:$0xff] 0.0
          %288 = vst [vmem:[#allocation2 + $0x160] sm:$0xff] 0.0
          %289 = vst [vmem:[#allocation2 + $0x168] sm:$0xff] 0.0
          %290 = vst [vmem:[#allocation2 + $0x170] sm:$0xff] 0.0
          %291 = vst [vmem:[#allocation2 + $0x178] sm:$0xff] 0.0
          %292 = vst [vmem:[#allocation2 + $0x180] sm:$0xff] 0.0
          %293 = vst [vmem:[#allocation2 + $0x188] sm:$0xff] 0.0
          %294 = vst [vmem:[#allocation2 + $0x190] sm:$0xff] 0.0
          %295 = vst [vmem:[#allocation2 + $0x198] sm:$0xff] 0.0
          %296 = vst [vmem:[#allocation2 + $0x1a0] sm:$0xff] 0.0
          %297 = vst [vmem:[#allocation2 + $0x1a8] sm:$0xff] 0.0
          %298 = vst [vmem:[#allocation2 + $0x1b0] sm:$0xff] 0.0
          %299 = vst [vmem:[#allocation2 + $0x1b8] sm:$0xff] 0.0
          %300 = vst [vmem:[#allocation2 + $0x1c0] sm:$0xff] 0.0
          %301 = vst [vmem:[#allocation2 + $0x1c8] sm:$0xff] 0.0
          %302 = vst [vmem:[#allocation2 + $0x1d0] sm:$0xff] 0.0
          %303 = vst [vmem:[#allocation2 + $0x1d8] sm:$0xff] 0.0
          %304 = vst [vmem:[#allocation2 + $0x1e0] sm:$0xff] 0.0
          %305 = vst [vmem:[#allocation2 + $0x1e8] sm:$0xff] 0.0
          %306 = vst [vmem:[#allocation2 + $0x1f0] sm:$0xff] 0.0
          %307 = vst [vmem:[#allocation2 + $0x1f8] sm:$0xff] 0.0
        $region40: #{tpu_custom_call.1} parent=27 // pred_fallthru
          _
        %v308 = vld [vmem:[#allocation2] sm:$0xff]
        %v309 = vld [vmem:[#allocation2 + $0x8] sm:$0xff]
        %v310 = vld [vmem:[#allocation2 + $0x10] sm:$0xff]
        %v311 = vld [vmem:[#allocation2 + $0x18] sm:$0xff]
        %v312 = vld [vmem:[#allocation2 + $0x20] sm:$0xff]
        %v313 = vld [vmem:[#allocation2 + $0x28] sm:$0xff]
        %v314 = vld [vmem:[#allocation2 + $0x30] sm:$0xff]
        %v315 = vld [vmem:[#allocation2 + $0x38] sm:$0xff]
        %v316 = vld [vmem:[#allocation2 + $0x40] sm:$0xff]
        %v317 = vld [vmem:[#allocation2 + $0x48] sm:$0xff]
        %v318 = vld [vmem:[#allocation2 + $0x50] sm:$0xff]
        %v319 = vld [vmem:[#allocation2 + $0x58] sm:$0xff]
        %v320 = vld [vmem:[#allocation2 + $0x60] sm:$0xff]
        %v321 = vld [vmem:[#allocation2 + $0x68] sm:$0xff]
        %v322 = vld [vmem:[#allocation2 + $0x70] sm:$0xff]
        %v323 = vld [vmem:[#allocation2 + $0x78] sm:$0xff]
        %v324 = vld [vmem:[#allocation2 + $0x80] sm:$0xff]
        %v325 = vld [vmem:[#allocation2 + $0x88] sm:$0xff]
        %v326 = vld [vmem:[#allocation2 + $0x90] sm:$0xff]
        %v327 = vld [vmem:[#allocation2 + $0x98] sm:$0xff]
        %v328 = vld [vmem:[#allocation2 + $0xa0] sm:$0xff]
        %v329 = vld [vmem:[#allocation2 + $0xa8] sm:$0xff]
        %v330 = vld [vmem:[#allocation2 + $0xb0] sm:$0xff]
        %v331 = vld [vmem:[#allocation2 + $0xb8] sm:$0xff]
        %v332 = vld [vmem:[#allocation2 + $0xc0] sm:$0xff]
        %v333 = vld [vmem:[#allocation2 + $0xc8] sm:$0xff]
        %v334 = vld [vmem:[#allocation2 + $0xd0] sm:$0xff]
        %v335 = vld [vmem:[#allocation2 + $0xd8] sm:$0xff]
        %v336 = vld [vmem:[#allocation2 + $0xe0] sm:$0xff]
        %v337 = vld [vmem:[#allocation2 + $0xe8] sm:$0xff]
        %v338 = vld [vmem:[#allocation2 + $0xf0] sm:$0xff]
        %v339 = vld [vmem:[#allocation2 + $0xf8] sm:$0xff]
        %v340 = vld [vmem:[#allocation2 + $0x100] sm:$0xff]
        %v341 = vld [vmem:[#allocation2 + $0x108] sm:$0xff]
        %v342 = vld [vmem:[#allocation2 + $0x110] sm:$0xff]
        %v343 = vld [vmem:[#allocation2 + $0x118] sm:$0xff]
        %v344 = vld [vmem:[#allocation2 + $0x120] sm:$0xff]
        %v345 = vld [vmem:[#allocation2 + $0x128] sm:$0xff]
        %v346 = vld [vmem:[#allocation2 + $0x130] sm:$0xff]
        %v347 = vld [vmem:[#allocation2 + $0x138] sm:$0xff]
        %v348 = vld [vmem:[#allocation2 + $0x140] sm:$0xff]
        %v349 = vld [vmem:[#allocation2 + $0x148] sm:$0xff]
        %v350 = vld [vmem:[#allocation2 + $0x150] sm:$0xff]
        %v351 = vld [vmem:[#allocation2 + $0x158] sm:$0xff]
        %v352 = vld [vmem:[#allocation2 + $0x160] sm:$0xff]
        %v353 = vld [vmem:[#allocation2 + $0x168] sm:$0xff]
        %v354 = vld [vmem:[#allocation2 + $0x170] sm:$0xff]
        %v355 = vld [vmem:[#allocation2 + $0x178] sm:$0xff]
        %v356 = vld [vmem:[#allocation2 + $0x180] sm:$0xff]
        %v357 = vld [vmem:[#allocation2 + $0x188] sm:$0xff]
        %v358 = vld [vmem:[#allocation2 + $0x190] sm:$0xff]
        %v359 = vld [vmem:[#allocation2 + $0x198] sm:$0xff]
        %v360 = vld [vmem:[#allocation2 + $0x1a0] sm:$0xff]
        %v361 = vld [vmem:[#allocation2 + $0x1a8] sm:$0xff]
        %v362 = vld [vmem:[#allocation2 + $0x1b0] sm:$0xff]
        %v363 = vld [vmem:[#allocation2 + $0x1b8] sm:$0xff]
        %v364 = vld [vmem:[#allocation2 + $0x1c0] sm:$0xff]
        %v365 = vld [vmem:[#allocation2 + $0x1c8] sm:$0xff]
        %v366 = vld [vmem:[#allocation2 + $0x1d0] sm:$0xff]
        %v367 = vld [vmem:[#allocation2 + $0x1d8] sm:$0xff]
        %v368 = vld [vmem:[#allocation2 + $0x1e0] sm:$0xff]
        %v369 = vld [vmem:[#allocation2 + $0x1e8] sm:$0xff]
        %v370 = vld [vmem:[#allocation2 + $0x1f0] sm:$0xff]
        %v371 = vld [vmem:[#allocation2 + $0x1f8] sm:$0xff]
        %v372 = vld [vmem:[%s199] sm:$0xff]
        %v373 = vld [vmem:[%s199 + $0x8] sm:$0xff]
        %v374 = vld [vmem:[%s199 + $0x10] sm:$0xff]
        %v375 = vld [vmem:[%s199 + $0x18] sm:$0xff]
        %v376 = vld [vmem:[%s199 + $0x20] sm:$0xff]
        %v377 = vld [vmem:[%s199 + $0x28] sm:$0xff]
        %v378 = vld [vmem:[%s199 + $0x30] sm:$0xff]
        %v379 = vld [vmem:[%s199 + $0x38] sm:$0xff]
        %v380 = vld [vmem:[%s199 + $0x40] sm:$0xff]
        %v381 = vld [vmem:[%s199 + $0x48] sm:$0xff]
        %v382 = vld [vmem:[%s199 + $0x50] sm:$0xff]
        %v383 = vld [vmem:[%s199 + $0x58] sm:$0xff]
        %v384 = vld [vmem:[%s199 + $0x60] sm:$0xff]
        %v385 = vld [vmem:[%s199 + $0x68] sm:$0xff]
        %v386 = vld [vmem:[%s199 + $0x70] sm:$0xff]
        %v387 = vld [vmem:[%s199 + $0x78] sm:$0xff]
        %v388 = vld [vmem:[%s199 + $0x80] sm:$0xff]
        %v389 = vld [vmem:[%s199 + $0x88] sm:$0xff]
        %v390 = vld [vmem:[%s199 + $0x90] sm:$0xff]
        %v391 = vld [vmem:[%s199 + $0x98] sm:$0xff]
        %v392 = vld [vmem:[%s199 + $0xa0] sm:$0xff]
        %v393 = vld [vmem:[%s199 + $0xa8] sm:$0xff]
        %v394 = vld [vmem:[%s199 + $0xb0] sm:$0xff]
        %v395 = vld [vmem:[%s199 + $0xb8] sm:$0xff]
        %v396 = vld [vmem:[%s199 + $0xc0] sm:$0xff]
        %v397 = vld [vmem:[%s199 + $0xc8] sm:$0xff]
        %v398 = vld [vmem:[%s199 + $0xd0] sm:$0xff]
        %v399 = vld [vmem:[%s199 + $0xd8] sm:$0xff]
        %v400 = vld [vmem:[%s199 + $0xe0] sm:$0xff]
        %v401 = vld [vmem:[%s199 + $0xe8] sm:$0xff]
        %v402 = vld [vmem:[%s199 + $0xf0] sm:$0xff]
        %v403 = vld [vmem:[%s199 + $0xf8] sm:$0xff]
        %v404 = vld [vmem:[%s199 + $0x100] sm:$0xff]
        %v405 = vld [vmem:[%s199 + $0x108] sm:$0xff]
        %v406 = vld [vmem:[%s199 + $0x110] sm:$0xff]
        %v407 = vld [vmem:[%s199 + $0x118] sm:$0xff]
        %v408 = vld [vmem:[%s199 + $0x120] sm:$0xff]
        %v409 = vld [vmem:[%s199 + $0x128] sm:$0xff]
        %v410 = vld [vmem:[%s199 + $0x130] sm:$0xff]
        %v411 = vld [vmem:[%s199 + $0x138] sm:$0xff]
        %v412 = vld [vmem:[%s199 + $0x140] sm:$0xff]
        %v413 = vld [vmem:[%s199 + $0x148] sm:$0xff]
        %v414 = vld [vmem:[%s199 + $0x150] sm:$0xff]
        %v415 = vld [vmem:[%s199 + $0x158] sm:$0xff]
        %v416 = vld [vmem:[%s199 + $0x160] sm:$0xff]
        %v417 = vld [vmem:[%s199 + $0x168] sm:$0xff]
        %v418 = vld [vmem:[%s199 + $0x170] sm:$0xff]
        %v419 = vld [vmem:[%s199 + $0x178] sm:$0xff]
        %v420 = vld [vmem:[%s199 + $0x180] sm:$0xff]
        %v421 = vld [vmem:[%s199 + $0x188] sm:$0xff]
        %v422 = vld [vmem:[%s199 + $0x190] sm:$0xff]
        %v423 = vld [vmem:[%s199 + $0x198] sm:$0xff]
        %v424 = vld [vmem:[%s199 + $0x1a0] sm:$0xff]
        %v425 = vld [vmem:[%s199 + $0x1a8] sm:$0xff]
        %v426 = vld [vmem:[%s199 + $0x1b0] sm:$0xff]
        %v427 = vld [vmem:[%s199 + $0x1b8] sm:$0xff]
        %v428 = vld [vmem:[%s199 + $0x1c0] sm:$0xff]
        %v429 = vld [vmem:[%s199 + $0x1c8] sm:$0xff]
        %v430 = vld [vmem:[%s199 + $0x1d0] sm:$0xff]
        %v431 = vld [vmem:[%s199 + $0x1d8] sm:$0xff]
        %v432 = vld [vmem:[%s199 + $0x1e0] sm:$0xff]
        %v433 = vld [vmem:[%s199 + $0x1e8] sm:$0xff]
        %v434 = vld [vmem:[%s199 + $0x1f0] sm:$0xff]
        %v435 = vld [vmem:[%s199 + $0x1f8] sm:$0xff]
        %v436 = vld [vmem:[%s209] sm:$0xf]
        %v437 = vld [vmem:[%s209 + $0x4] sm:$0xf]
        %v438 = vld [vmem:[%s209 + $0x8] sm:$0xf]
        %v439 = vld [vmem:[%s209 + $0xc] sm:$0xf]
        %v440 = vld [vmem:[%s209 + $0x10] sm:$0xf]
        %v441 = vld [vmem:[%s209 + $0x14] sm:$0xf]
        %v442 = vld [vmem:[%s209 + $0x18] sm:$0xf]
        %v443 = vld [vmem:[%s209 + $0x1c] sm:$0xf]
        %v444 = vld [vmem:[%s209 + $0x20] sm:$0xf]
        %v445 = vld [vmem:[%s209 + $0x24] sm:$0xf]
        %v446 = vld [vmem:[%s209 + $0x28] sm:$0xf]
        %v447 = vld [vmem:[%s209 + $0x2c] sm:$0xf]
        %v448 = vld [vmem:[%s209 + $0x30] sm:$0xf]
        %v449 = vld [vmem:[%s209 + $0x34] sm:$0xf]
        %v450 = vld [vmem:[%s209 + $0x38] sm:$0xf]
        %v451 = vld [vmem:[%s209 + $0x3c] sm:$0xf]
        %v452 = vld [vmem:[%s209 + $0x40] sm:$0xf]
        %v453 = vld [vmem:[%s209 + $0x44] sm:$0xf]
        %v454 = vld [vmem:[%s209 + $0x48] sm:$0xf]
        %v455 = vld [vmem:[%s209 + $0x4c] sm:$0xf]
        %v456 = vld [vmem:[%s209 + $0x50] sm:$0xf]
        %v457 = vld [vmem:[%s209 + $0x54] sm:$0xf]
        %v458 = vld [vmem:[%s209 + $0x58] sm:$0xf]
        %v459 = vld [vmem:[%s209 + $0x5c] sm:$0xf]
        %v460 = vld [vmem:[%s209 + $0x60] sm:$0xf]
        %v461 = vld [vmem:[%s209 + $0x64] sm:$0xf]
        %v462 = vld [vmem:[%s209 + $0x68] sm:$0xf]
        %v463 = vld [vmem:[%s209 + $0x6c] sm:$0xf]
        %v464 = vld [vmem:[%s209 + $0x70] sm:$0xf]
        %v465 = vld [vmem:[%s209 + $0x74] sm:$0xf]
        %v466 = vld [vmem:[%s209 + $0x78] sm:$0xf]
        %v467 = vld [vmem:[%s209 + $0x7c] sm:$0xf]
        %v532 = vunpack.c.l.b16 %v372
        %v533 = vunpack.c.h.b16 %v372
        %v534 = vunpack.c.l.b16 %v373
        %v535 = vunpack.c.h.b16 %v373
        %v536 = vunpack.c.l.b16 %v374
        %v537 = vunpack.c.h.b16 %v374
        %v538 = vunpack.c.l.b16 %v375
        %v539 = vunpack.c.h.b16 %v375
        %v540 = vunpack.c.l.b16 %v376
        %v541 = vunpack.c.h.b16 %v376
        %v542 = vunpack.c.l.b16 %v377
        %v543 = vunpack.c.h.b16 %v377
        %v544 = vunpack.c.l.b16 %v378
        %v545 = vunpack.c.h.b16 %v378
        %v546 = vunpack.c.l.b16 %v379
        %v547 = vunpack.c.h.b16 %v379
        %v548 = vunpack.c.l.b16 %v380
        %v549 = vunpack.c.h.b16 %v380
        %v550 = vunpack.c.l.b16 %v381
        %v551 = vunpack.c.h.b16 %v381
        %v552 = vunpack.c.l.b16 %v382
        %v553 = vunpack.c.h.b16 %v382
        %v554 = vunpack.c.l.b16 %v383
        %v555 = vunpack.c.h.b16 %v383
        %v556 = vunpack.c.l.b16 %v384
        %v557 = vunpack.c.h.b16 %v384
        %v558 = vunpack.c.l.b16 %v385
        %v559 = vunpack.c.h.b16 %v385
        %v560 = vunpack.c.l.b16 %v386
        %v561 = vunpack.c.h.b16 %v386
        %v562 = vunpack.c.l.b16 %v387
        %v563 = vunpack.c.h.b16 %v387
        %v564 = vunpack.c.l.b16 %v388
        %v565 = vunpack.c.h.b16 %v388
        %v566 = vunpack.c.l.b16 %v389
        %v567 = vunpack.c.h.b16 %v389
        %v568 = vunpack.c.l.b16 %v390
        %v569 = vunpack.c.h.b16 %v390
        %v570 = vunpack.c.l.b16 %v391
        %v571 = vunpack.c.h.b16 %v391
        %v572 = vunpack.c.l.b16 %v392
        %v573 = vunpack.c.h.b16 %v392
        %v574 = vunpack.c.l.b16 %v393
        %v575 = vunpack.c.h.b16 %v393
        %v576 = vunpack.c.l.b16 %v394
        %v577 = vunpack.c.h.b16 %v394
        %v578 = vunpack.c.l.b16 %v395
        %v579 = vunpack.c.h.b16 %v395
        %v580 = vunpack.c.l.b16 %v396
        %v581 = vunpack.c.h.b16 %v396
        %v582 = vunpack.c.l.b16 %v397
        %v583 = vunpack.c.h.b16 %v397
        %v584 = vunpack.c.l.b16 %v398
        %v585 = vunpack.c.h.b16 %v398
        %v586 = vunpack.c.l.b16 %v399
        %v587 = vunpack.c.h.b16 %v399
        %v588 = vunpack.c.l.b16 %v400
        %v589 = vunpack.c.h.b16 %v400
        %v590 = vunpack.c.l.b16 %v401
        %v591 = vunpack.c.h.b16 %v401
        %v592 = vunpack.c.l.b16 %v402
        %v593 = vunpack.c.h.b16 %v402
        %v594 = vunpack.c.l.b16 %v403
        %v595 = vunpack.c.h.b16 %v403
        %v596 = vunpack.c.l.b16 %v404
        %v597 = vunpack.c.h.b16 %v404
        %v598 = vunpack.c.l.b16 %v405
        %v599 = vunpack.c.h.b16 %v405
        %v600 = vunpack.c.l.b16 %v406
        %v601 = vunpack.c.h.b16 %v406
        %v602 = vunpack.c.l.b16 %v407
        %v603 = vunpack.c.h.b16 %v407
        %v604 = vunpack.c.l.b16 %v408
        %v605 = vunpack.c.h.b16 %v408
        %v606 = vunpack.c.l.b16 %v409
        %v607 = vunpack.c.h.b16 %v409
        %v608 = vunpack.c.l.b16 %v410
        %v609 = vunpack.c.h.b16 %v410
        %v610 = vunpack.c.l.b16 %v411
        %v611 = vunpack.c.h.b16 %v411
        %v612 = vunpack.c.l.b16 %v412
        %v613 = vunpack.c.h.b16 %v412
        %v614 = vunpack.c.l.b16 %v413
        %v615 = vunpack.c.h.b16 %v413
        %v616 = vunpack.c.l.b16 %v414
        %v617 = vunpack.c.h.b16 %v414
        %v618 = vunpack.c.l.b16 %v415
        %v619 = vunpack.c.h.b16 %v415
        %v620 = vunpack.c.l.b16 %v416
        %v621 = vunpack.c.h.b16 %v416
        %v622 = vunpack.c.l.b16 %v417
        %v623 = vunpack.c.h.b16 %v417
        %v624 = vunpack.c.l.b16 %v418
        %v625 = vunpack.c.h.b16 %v418
        %v626 = vunpack.c.l.b16 %v419
        %v627 = vunpack.c.h.b16 %v419
        %v628 = vunpack.c.l.b16 %v420
        %v629 = vunpack.c.h.b16 %v420
        %v630 = vunpack.c.l.b16 %v421
        %v631 = vunpack.c.h.b16 %v421
        %v632 = vunpack.c.l.b16 %v422
        %v633 = vunpack.c.h.b16 %v422
        %v634 = vunpack.c.l.b16 %v423
        %v635 = vunpack.c.h.b16 %v423
        %v636 = vunpack.c.l.b16 %v424
        %v637 = vunpack.c.h.b16 %v424
        %v638 = vunpack.c.l.b16 %v425
        %v639 = vunpack.c.h.b16 %v425
        %v640 = vunpack.c.l.b16 %v426
        %v641 = vunpack.c.h.b16 %v426
        %v642 = vunpack.c.l.b16 %v427
        %v643 = vunpack.c.h.b16 %v427
        %v644 = vunpack.c.l.b16 %v428
        %v645 = vunpack.c.h.b16 %v428
        %v646 = vunpack.c.l.b16 %v429
        %v647 = vunpack.c.h.b16 %v429
        %v648 = vunpack.c.l.b16 %v430
        %v649 = vunpack.c.h.b16 %v430
        %v650 = vunpack.c.l.b16 %v431
        %v651 = vunpack.c.h.b16 %v431
        %v652 = vunpack.c.l.b16 %v432
        %v653 = vunpack.c.h.b16 %v432
        %v654 = vunpack.c.l.b16 %v433
        %v655 = vunpack.c.h.b16 %v433
        %v656 = vunpack.c.l.b16 %v434
        %v657 = vunpack.c.h.b16 %v434
        %v658 = vunpack.c.l.b16 %v435
        %v659 = vunpack.c.h.b16 %v435
        %v660 = vpack.c.b16 %v534, %v532
        %v661 = vpack.c.b16 %v535, %v533
        %v662 = vpack.c.b16 %v538, %v536
        %v663 = vpack.c.b16 %v539, %v537
        %v664 = vpack.c.b16 %v542, %v540
        %v665 = vpack.c.b16 %v543, %v541
        %v666 = vpack.c.b16 %v546, %v544
        %v667 = vpack.c.b16 %v547, %v545
        %v668 = vpack.c.b16 %v550, %v548
        %v669 = vpack.c.b16 %v551, %v549
        %v670 = vpack.c.b16 %v554, %v552
        %v671 = vpack.c.b16 %v555, %v553
        %v672 = vpack.c.b16 %v558, %v556
        %v673 = vpack.c.b16 %v559, %v557
        %v674 = vpack.c.b16 %v562, %v560
        %v675 = vpack.c.b16 %v563, %v561
        %v676 = vpack.c.b16 %v566, %v564
        %v677 = vpack.c.b16 %v567, %v565
        %v678 = vpack.c.b16 %v570, %v568
        %v679 = vpack.c.b16 %v571, %v569
        %v680 = vpack.c.b16 %v574, %v572
        %v681 = vpack.c.b16 %v575, %v573
        %v682 = vpack.c.b16 %v578, %v576
        %v683 = vpack.c.b16 %v579, %v577
        %v684 = vpack.c.b16 %v582, %v580
        %v685 = vpack.c.b16 %v583, %v581
        %v686 = vpack.c.b16 %v586, %v584
        %v687 = vpack.c.b16 %v587, %v585
        %v688 = vpack.c.b16 %v590, %v588
        %v689 = vpack.c.b16 %v591, %v589
        %v690 = vpack.c.b16 %v594, %v592
        %v691 = vpack.c.b16 %v595, %v593
        %v692 = vpack.c.b16 %v598, %v596
        %v693 = vpack.c.b16 %v599, %v597
        %v694 = vpack.c.b16 %v602, %v600
        %v695 = vpack.c.b16 %v603, %v601
        %v696 = vpack.c.b16 %v606, %v604
        %v697 = vpack.c.b16 %v607, %v605
        %v698 = vpack.c.b16 %v610, %v608
        %v699 = vpack.c.b16 %v611, %v609
        %v700 = vpack.c.b16 %v614, %v612
        %v701 = vpack.c.b16 %v615, %v613
        %v702 = vpack.c.b16 %v618, %v616
        %v703 = vpack.c.b16 %v619, %v617
        %v704 = vpack.c.b16 %v622, %v620
        %v705 = vpack.c.b16 %v623, %v621
        %v706 = vpack.c.b16 %v626, %v624
        %v707 = vpack.c.b16 %v627, %v625
        %v708 = vpack.c.b16 %v630, %v628
        %v709 = vpack.c.b16 %v631, %v629
        %v710 = vpack.c.b16 %v634, %v632
        %v711 = vpack.c.b16 %v635, %v633
        %v712 = vpack.c.b16 %v638, %v636
        %v713 = vpack.c.b16 %v639, %v637
        %v714 = vpack.c.b16 %v642, %v640
        %v715 = vpack.c.b16 %v643, %v641
        %v716 = vpack.c.b16 %v646, %v644
        %v717 = vpack.c.b16 %v647, %v645
        %v718 = vpack.c.b16 %v650, %v648
        %v719 = vpack.c.b16 %v651, %v649
        %v720 = vpack.c.b16 %v654, %v652
        %v721 = vpack.c.b16 %v655, %v653
        %v722 = vpack.c.b16 %v658, %v656
        %v723 = vpack.c.b16 %v659, %v657
        %v820 = vunpack.c.l.b16 %v436
        %v821 = vunpack.c.l.b16 %v437
        %v822 = vunpack.c.l.b16 %v438
        %v823 = vunpack.c.l.b16 %v439
        %v824 = vunpack.c.l.b16 %v440
        %v825 = vunpack.c.l.b16 %v441
        %v826 = vunpack.c.l.b16 %v442
        %v827 = vunpack.c.l.b16 %v443
        %v828 = vunpack.c.l.b16 %v444
        %v829 = vunpack.c.l.b16 %v445
        %v830 = vunpack.c.l.b16 %v446
        %v831 = vunpack.c.l.b16 %v447
        %v832 = vunpack.c.l.b16 %v448
        %v833 = vunpack.c.l.b16 %v449
        %v834 = vunpack.c.l.b16 %v450
        %v835 = vunpack.c.l.b16 %v451
        %v836 = vunpack.c.l.b16 %v452
        %v837 = vunpack.c.l.b16 %v453
        %v838 = vunpack.c.l.b16 %v454
        %v839 = vunpack.c.l.b16 %v455
        %v840 = vunpack.c.l.b16 %v456
        %v841 = vunpack.c.l.b16 %v457
        %v842 = vunpack.c.l.b16 %v458
        %v843 = vunpack.c.l.b16 %v459
        %v844 = vunpack.c.l.b16 %v460
        %v845 = vunpack.c.l.b16 %v461
        %v846 = vunpack.c.l.b16 %v462
        %v847 = vunpack.c.l.b16 %v463
        %v848 = vunpack.c.l.b16 %v464
        %v849 = vunpack.c.l.b16 %v465
        %v850 = vunpack.c.l.b16 %v466
        %v851 = vunpack.c.l.b16 %v467
        %v852 = vpack.c.b16 %v821, %v820
        %v853 = vpack.c.b16 %v823, %v822
        %v854 = vpack.c.b16 %v825, %v824
        %v855 = vpack.c.b16 %v827, %v826
        %v856 = vpack.c.b16 %v829, %v828
        %v857 = vpack.c.b16 %v831, %v830
        %v858 = vpack.c.b16 %v833, %v832
        %v859 = vpack.c.b16 %v835, %v834
        %v860 = vpack.c.b16 %v837, %v836
        %v861 = vpack.c.b16 %v839, %v838
        %v862 = vpack.c.b16 %v841, %v840
        %v863 = vpack.c.b16 %v843, %v842
        %v864 = vpack.c.b16 %v845, %v844
        %v865 = vpack.c.b16 %v847, %v846
        %v866 = vpack.c.b16 %v849, %v848
        %v867 = vpack.c.b16 %v851, %v850
        %884 = vmatpush.bf16.msra.mxu0 %v859
        %885 = vmatpush.bf16.msra.mxu0 %v858
        %886 = vmatpush.bf16.msra.mxu0 %v857
        %887 = vmatpush.bf16.msra.mxu0 %v856
        %888 = vmatpush.bf16.msra.mxu0 %v855
        %889 = vmatpush.bf16.msra.mxu0 %v854
        %890 = vmatpush.bf16.msra.mxu0 %v853
        %891 = vmatpush.bf16.msra.mxu0 %v852
        %892 = vmatmul.bf16.gmra.mxu0 %v660
        %v893 = vpop.f32.mrf.mxu0
        %v894 = vadd.f32 0.0, %v893
        %v895 = vpop.f32.mrf.mxu0
        %v896 = vadd.f32 0.0, %v895
        %897 = vmatmul.bf16.gmra.mxu0 %v662
        %v898 = vpop.f32.mrf.mxu0
        %v899 = vadd.f32 0.0, %v898
        %v900 = vpop.f32.mrf.mxu0
        %v901 = vadd.f32 0.0, %v900
        %902 = vmatmul.bf16.gmra.mxu0 %v664
        %v903 = vpop.f32.mrf.mxu0
        %v904 = vadd.f32 0.0, %v903
        %v905 = vpop.f32.mrf.mxu0
        %v906 = vadd.f32 0.0, %v905
        %907 = vmatmul.bf16.gmra.mxu0 %v666
        %v908 = vpop.f32.mrf.mxu0
        %v909 = vadd.f32 0.0, %v908
        %v910 = vpop.f32.mrf.mxu0
        %v911 = vadd.f32 0.0, %v910
        %912 = vmatmul.bf16.gmra.mxu0 %v668
        %v913 = vpop.f32.mrf.mxu0
        %v914 = vadd.f32 0.0, %v913
        %v915 = vpop.f32.mrf.mxu0
        %v916 = vadd.f32 0.0, %v915
        %917 = vmatmul.bf16.gmra.mxu0 %v670
        %v918 = vpop.f32.mrf.mxu0
        %v919 = vadd.f32 0.0, %v918
        %v920 = vpop.f32.mrf.mxu0
        %v921 = vadd.f32 0.0, %v920
        %922 = vmatmul.bf16.gmra.mxu0 %v672
        %v923 = vpop.f32.mrf.mxu0
        %v924 = vadd.f32 0.0, %v923
        %v925 = vpop.f32.mrf.mxu0
        %v926 = vadd.f32 0.0, %v925
        %927 = vmatmul.bf16.gmra.mxu0 %v674
        %v928 = vpop.f32.mrf.mxu0
        %v929 = vadd.f32 0.0, %v928
        %v930 = vpop.f32.mrf.mxu0
        %v931 = vadd.f32 0.0, %v930
        %932 = vmatmul.bf16.gmra.mxu0 %v676
        %v933 = vpop.f32.mrf.mxu0
        %v934 = vadd.f32 0.0, %v933
        %v935 = vpop.f32.mrf.mxu0
        %v936 = vadd.f32 0.0, %v935
        %937 = vmatmul.bf16.gmra.mxu0 %v678
        %v938 = vpop.f32.mrf.mxu0
        %v939 = vadd.f32 0.0, %v938
        %v940 = vpop.f32.mrf.mxu0
        %v941 = vadd.f32 0.0, %v940
        %942 = vmatmul.bf16.gmra.mxu0 %v680
        %v943 = vpop.f32.mrf.mxu0
        %v944 = vadd.f32 0.0, %v943
        %v945 = vpop.f32.mrf.mxu0
        %v946 = vadd.f32 0.0, %v945
        %947 = vmatmul.bf16.gmra.mxu0 %v682
        %v948 = vpop.f32.mrf.mxu0
        %v949 = vadd.f32 0.0, %v948
        %v950 = vpop.f32.mrf.mxu0
        %v951 = vadd.f32 0.0, %v950
        %952 = vmatmul.bf16.gmra.mxu0 %v684
        %v953 = vpop.f32.mrf.mxu0
        %v954 = vadd.f32 0.0, %v953
        %v955 = vpop.f32.mrf.mxu0
        %v956 = vadd.f32 0.0, %v955
        %957 = vmatmul.bf16.gmra.mxu0 %v686
        %v958 = vpop.f32.mrf.mxu0
        %v959 = vadd.f32 0.0, %v958
        %v960 = vpop.f32.mrf.mxu0
        %v961 = vadd.f32 0.0, %v960
        %962 = vmatmul.bf16.gmra.mxu0 %v688
        %v963 = vpop.f32.mrf.mxu0
        %v964 = vadd.f32 0.0, %v963
        %v965 = vpop.f32.mrf.mxu0
        %v966 = vadd.f32 0.0, %v965
        %967 = vmatmul.bf16.gmra.mxu0 %v690
        %v968 = vpop.f32.mrf.mxu0
        %v969 = vadd.f32 0.0, %v968
        %v970 = vpop.f32.mrf.mxu0
        %v971 = vadd.f32 0.0, %v970
        %972 = vmatmul.bf16.gmra.mxu0 %v692
        %v973 = vpop.f32.mrf.mxu0
        %v974 = vadd.f32 0.0, %v973
        %v975 = vpop.f32.mrf.mxu0
        %v976 = vadd.f32 0.0, %v975
        %977 = vmatmul.bf16.gmra.mxu0 %v694
        %v978 = vpop.f32.mrf.mxu0
        %v979 = vadd.f32 0.0, %v978
        %v980 = vpop.f32.mrf.mxu0
        %v981 = vadd.f32 0.0, %v980
        %982 = vmatmul.bf16.gmra.mxu0 %v696
        %v983 = vpop.f32.mrf.mxu0
        %v984 = vadd.f32 0.0, %v983
        %v985 = vpop.f32.mrf.mxu0
        %v986 = vadd.f32 0.0, %v985
        %987 = vmatmul.bf16.gmra.mxu0 %v698
        %v988 = vpop.f32.mrf.mxu0
        %v989 = vadd.f32 0.0, %v988
        %v990 = vpop.f32.mrf.mxu0
        %v991 = vadd.f32 0.0, %v990
        %992 = vmatmul.bf16.gmra.mxu0 %v700
        %v993 = vpop.f32.mrf.mxu0
        %v994 = vadd.f32 0.0, %v993
        %v995 = vpop.f32.mrf.mxu0
        %v996 = vadd.f32 0.0, %v995
        %997 = vmatmul.bf16.gmra.mxu0 %v702
        %v998 = vpop.f32.mrf.mxu0
        %v999 = vadd.f32 0.0, %v998
        %v1000 = vpop.f32.mrf.mxu0
        %v1001 = vadd.f32 0.0, %v1000
        %1002 = vmatmul.bf16.gmra.mxu0 %v704
        %v1003 = vpop.f32.mrf.mxu0
        %v1004 = vadd.f32 0.0, %v1003
        %v1005 = vpop.f32.mrf.mxu0
        %v1006 = vadd.f32 0.0, %v1005
        %1007 = vmatmul.bf16.gmra.mxu0 %v706
        %v1008 = vpop.f32.mrf.mxu0
        %v1009 = vadd.f32 0.0, %v1008
        %v1010 = vpop.f32.mrf.mxu0
        %v1011 = vadd.f32 0.0, %v1010
        %1012 = vmatmul.bf16.gmra.mxu0 %v708
        %v1013 = vpop.f32.mrf.mxu0
        %v1014 = vadd.f32 0.0, %v1013
        %v1015 = vpop.f32.mrf.mxu0
        %v1016 = vadd.f32 0.0, %v1015
        %1017 = vmatmul.bf16.gmra.mxu0 %v710
        %v1018 = vpop.f32.mrf.mxu0
        %v1019 = vadd.f32 0.0, %v1018
        %v1020 = vpop.f32.mrf.mxu0
        %v1021 = vadd.f32 0.0, %v1020
        %1022 = vmatmul.bf16.gmra.mxu0 %v712
        %v1023 = vpop.f32.mrf.mxu0
        %v1024 = vadd.f32 0.0, %v1023
        %v1025 = vpop.f32.mrf.mxu0
        %v1026 = vadd.f32 0.0, %v1025
        %1027 = vmatmul.bf16.gmra.mxu0 %v714
        %v1028 = vpop.f32.mrf.mxu0
        %v1029 = vadd.f32 0.0, %v1028
        %v1030 = vpop.f32.mrf.mxu0
        %v1031 = vadd.f32 0.0, %v1030
        %1032 = vmatmul.bf16.gmra.mxu0 %v716
        %v1033 = vpop.f32.mrf.mxu0
        %v1034 = vadd.f32 0.0, %v1033
        %v1035 = vpop.f32.mrf.mxu0
        %v1036 = vadd.f32 0.0, %v1035
        %1037 = vmatmul.bf16.gmra.mxu0 %v718
        %v1038 = vpop.f32.mrf.mxu0
        %v1039 = vadd.f32 0.0, %v1038
        %v1040 = vpop.f32.mrf.mxu0
        %v1041 = vadd.f32 0.0, %v1040
        %1042 = vmatmul.bf16.gmra.mxu0 %v720
        %v1043 = vpop.f32.mrf.mxu0
        %v1044 = vadd.f32 0.0, %v1043
        %v1045 = vpop.f32.mrf.mxu0
        %v1046 = vadd.f32 0.0, %v1045
        %1047 = vmatmul.bf16.gmra.mxu0 %v722
        %v1048 = vpop.f32.mrf.mxu0
        %v1049 = vadd.f32 0.0, %v1048
        %v1050 = vpop.f32.mrf.mxu0
        %v1051 = vadd.f32 0.0, %v1050
        %1052 = vdwg.mxu0
        %1053 = vmatpush.bf16.msra.mxu0 %v867
        %1054 = vmatpush.bf16.msra.mxu0 %v866
        %1055 = vmatpush.bf16.msra.mxu0 %v865
        %1056 = vmatpush.bf16.msra.mxu0 %v864
        %1057 = vmatpush.bf16.msra.mxu0 %v863
        %1058 = vmatpush.bf16.msra.mxu0 %v862
        %1059 = vmatpush.bf16.msra.mxu0 %v861
        %1060 = vmatpush.bf16.msra.mxu0 %v860
        %1061 = vmatmul.bf16.gmra.mxu0 %v661
        %v1062 = vpop.f32.mrf.mxu0
        %v1063 = vadd.f32 %v894, %v1062
        %v1064 = vpop.f32.mrf.mxu0
        %v1065 = vadd.f32 %v896, %v1064
        %1066 = vmatmul.bf16.gmra.mxu0 %v663
        %v1067 = vpop.f32.mrf.mxu0
        %v1068 = vadd.f32 %v899, %v1067
        %v1069 = vpop.f32.mrf.mxu0
        %v1070 = vadd.f32 %v901, %v1069
        %1071 = vmatmul.bf16.gmra.mxu0 %v665
        %v1072 = vpop.f32.mrf.mxu0
        %v1073 = vadd.f32 %v904, %v1072
        %v1074 = vpop.f32.mrf.mxu0
        %v1075 = vadd.f32 %v906, %v1074
        %1076 = vmatmul.bf16.gmra.mxu0 %v667
        %v1077 = vpop.f32.mrf.mxu0
        %v1078 = vadd.f32 %v909, %v1077
        %v1079 = vpop.f32.mrf.mxu0
        %v1080 = vadd.f32 %v911, %v1079
        %1081 = vmatmul.bf16.gmra.mxu0 %v669
        %v1082 = vpop.f32.mrf.mxu0
        %v1083 = vadd.f32 %v914, %v1082
        %v1084 = vpop.f32.mrf.mxu0
        %v1085 = vadd.f32 %v916, %v1084
        %1086 = vmatmul.bf16.gmra.mxu0 %v671
        %v1087 = vpop.f32.mrf.mxu0
        %v1088 = vadd.f32 %v919, %v1087
        %v1089 = vpop.f32.mrf.mxu0
        %v1090 = vadd.f32 %v921, %v1089
        %1091 = vmatmul.bf16.gmra.mxu0 %v673
        %v1092 = vpop.f32.mrf.mxu0
        %v1093 = vadd.f32 %v924, %v1092
        %v1094 = vpop.f32.mrf.mxu0
        %v1095 = vadd.f32 %v926, %v1094
        %1096 = vmatmul.bf16.gmra.mxu0 %v675
        %v1097 = vpop.f32.mrf.mxu0
        %v1098 = vadd.f32 %v929, %v1097
        %v1099 = vpop.f32.mrf.mxu0
        %v1100 = vadd.f32 %v931, %v1099
        %1101 = vmatmul.bf16.gmra.mxu0 %v677
        %v1102 = vpop.f32.mrf.mxu0
        %v1103 = vadd.f32 %v934, %v1102
        %v1104 = vpop.f32.mrf.mxu0
        %v1105 = vadd.f32 %v936, %v1104
        %1106 = vmatmul.bf16.gmra.mxu0 %v679
        %v1107 = vpop.f32.mrf.mxu0
        %v1108 = vadd.f32 %v939, %v1107
        %v1109 = vpop.f32.mrf.mxu0
        %v1110 = vadd.f32 %v941, %v1109
        %1111 = vmatmul.bf16.gmra.mxu0 %v681
        %v1112 = vpop.f32.mrf.mxu0
        %v1113 = vadd.f32 %v944, %v1112
        %v1114 = vpop.f32.mrf.mxu0
        %v1115 = vadd.f32 %v946, %v1114
        %1116 = vmatmul.bf16.gmra.mxu0 %v683
        %v1117 = vpop.f32.mrf.mxu0
        %v1118 = vadd.f32 %v949, %v1117
        %v1119 = vpop.f32.mrf.mxu0
        %v1120 = vadd.f32 %v951, %v1119
        %1121 = vmatmul.bf16.gmra.mxu0 %v685
        %v1122 = vpop.f32.mrf.mxu0
        %v1123 = vadd.f32 %v954, %v1122
        %v1124 = vpop.f32.mrf.mxu0
        %v1125 = vadd.f32 %v956, %v1124
        %1126 = vmatmul.bf16.gmra.mxu0 %v687
        %v1127 = vpop.f32.mrf.mxu0
        %v1128 = vadd.f32 %v959, %v1127
        %v1129 = vpop.f32.mrf.mxu0
        %v1130 = vadd.f32 %v961, %v1129
        %1131 = vmatmul.bf16.gmra.mxu0 %v689
        %v1132 = vpop.f32.mrf.mxu0
        %v1133 = vadd.f32 %v964, %v1132
        %v1134 = vpop.f32.mrf.mxu0
        %v1135 = vadd.f32 %v966, %v1134
        %1136 = vmatmul.bf16.gmra.mxu0 %v691
        %v1137 = vpop.f32.mrf.mxu0
        %v1138 = vadd.f32 %v969, %v1137
        %v1139 = vpop.f32.mrf.mxu0
        %v1140 = vadd.f32 %v971, %v1139
        %1141 = vmatmul.bf16.gmra.mxu0 %v693
        %v1142 = vpop.f32.mrf.mxu0
        %v1143 = vadd.f32 %v974, %v1142
        %v1144 = vpop.f32.mrf.mxu0
        %v1145 = vadd.f32 %v976, %v1144
        %1146 = vmatmul.bf16.gmra.mxu0 %v695
        %v1147 = vpop.f32.mrf.mxu0
        %v1148 = vadd.f32 %v979, %v1147
        %v1149 = vpop.f32.mrf.mxu0
        %v1150 = vadd.f32 %v981, %v1149
        %1151 = vmatmul.bf16.gmra.mxu0 %v697
        %v1152 = vpop.f32.mrf.mxu0
        %v1153 = vadd.f32 %v984, %v1152
        %v1154 = vpop.f32.mrf.mxu0
        %v1155 = vadd.f32 %v986, %v1154
        %1156 = vmatmul.bf16.gmra.mxu0 %v699
        %v1157 = vpop.f32.mrf.mxu0
        %v1158 = vadd.f32 %v989, %v1157
        %v1159 = vpop.f32.mrf.mxu0
        %v1160 = vadd.f32 %v991, %v1159
        %1161 = vmatmul.bf16.gmra.mxu0 %v701
        %v1162 = vpop.f32.mrf.mxu0
        %v1163 = vadd.f32 %v994, %v1162
        %v1164 = vpop.f32.mrf.mxu0
        %v1165 = vadd.f32 %v996, %v1164
        %1166 = vmatmul.bf16.gmra.mxu0 %v703
        %v1167 = vpop.f32.mrf.mxu0
        %v1168 = vadd.f32 %v999, %v1167
        %v1169 = vpop.f32.mrf.mxu0
        %v1170 = vadd.f32 %v1001, %v1169
        %1171 = vmatmul.bf16.gmra.mxu0 %v705
        %v1172 = vpop.f32.mrf.mxu0
        %v1173 = vadd.f32 %v1004, %v1172
        %v1174 = vpop.f32.mrf.mxu0
        %v1175 = vadd.f32 %v1006, %v1174
        %1176 = vmatmul.bf16.gmra.mxu0 %v707
        %v1177 = vpop.f32.mrf.mxu0
        %v1178 = vadd.f32 %v1009, %v1177
        %v1179 = vpop.f32.mrf.mxu0
        %v1180 = vadd.f32 %v1011, %v1179
        %1181 = vmatmul.bf16.gmra.mxu0 %v709
        %v1182 = vpop.f32.mrf.mxu0
        %v1183 = vadd.f32 %v1014, %v1182
        %v1184 = vpop.f32.mrf.mxu0
        %v1185 = vadd.f32 %v1016, %v1184
        %1186 = vmatmul.bf16.gmra.mxu0 %v711
        %v1187 = vpop.f32.mrf.mxu0
        %v1188 = vadd.f32 %v1019, %v1187
        %v1189 = vpop.f32.mrf.mxu0
        %v1190 = vadd.f32 %v1021, %v1189
        %1191 = vmatmul.bf16.gmra.mxu0 %v713
        %v1192 = vpop.f32.mrf.mxu0
        %v1193 = vadd.f32 %v1024, %v1192
        %v1194 = vpop.f32.mrf.mxu0
        %v1195 = vadd.f32 %v1026, %v1194
        %1196 = vmatmul.bf16.gmra.mxu0 %v715
        %v1197 = vpop.f32.mrf.mxu0
        %v1198 = vadd.f32 %v1029, %v1197
        %v1199 = vpop.f32.mrf.mxu0
        %v1200 = vadd.f32 %v1031, %v1199
        %1201 = vmatmul.bf16.gmra.mxu0 %v717
        %v1202 = vpop.f32.mrf.mxu0
        %v1203 = vadd.f32 %v1034, %v1202
        %v1204 = vpop.f32.mrf.mxu0
        %v1205 = vadd.f32 %v1036, %v1204
        %1206 = vmatmul.bf16.gmra.mxu0 %v719
        %v1207 = vpop.f32.mrf.mxu0
        %v1208 = vadd.f32 %v1039, %v1207
        %v1209 = vpop.f32.mrf.mxu0
        %v1210 = vadd.f32 %v1041, %v1209
        %1211 = vmatmul.bf16.gmra.mxu0 %v721
        %v1212 = vpop.f32.mrf.mxu0
        %v1213 = vadd.f32 %v1044, %v1212
        %v1214 = vpop.f32.mrf.mxu0
        %v1215 = vadd.f32 %v1046, %v1214
        %1216 = vmatmul.bf16.gmra.mxu0 %v723
        %v1217 = vpop.f32.mrf.mxu0
        %v1218 = vadd.f32 %v1049, %v1217
        %v1219 = vpop.f32.mrf.mxu0
        %v1220 = vadd.f32 %v1051, %v1219
        %1221 = vdwg.mxu0
        %v1222 = vadd.f32 %v308, %v1063
        %v1223 = vadd.f32 %v309, %v1065
        %v1224 = vadd.f32 %v310, %v1068
        %v1225 = vadd.f32 %v311, %v1070
        %v1226 = vadd.f32 %v312, %v1073
        %v1227 = vadd.f32 %v313, %v1075
        %v1228 = vadd.f32 %v314, %v1078
        %v1229 = vadd.f32 %v315, %v1080
        %v1230 = vadd.f32 %v316, %v1083
        %v1231 = vadd.f32 %v317, %v1085
        %v1232 = vadd.f32 %v318, %v1088
        %v1233 = vadd.f32 %v319, %v1090
        %v1234 = vadd.f32 %v320, %v1093
        %v1235 = vadd.f32 %v321, %v1095
        %v1236 = vadd.f32 %v322, %v1098
        %v1237 = vadd.f32 %v323, %v1100
        %v1238 = vadd.f32 %v324, %v1103
        %v1239 = vadd.f32 %v325, %v1105
        %v1240 = vadd.f32 %v326, %v1108
        %v1241 = vadd.f32 %v327, %v1110
        %v1242 = vadd.f32 %v328, %v1113
        %v1243 = vadd.f32 %v329, %v1115
        %v1244 = vadd.f32 %v330, %v1118
        %v1245 = vadd.f32 %v331, %v1120
        %v1246 = vadd.f32 %v332, %v1123
        %v1247 = vadd.f32 %v333, %v1125
        %v1248 = vadd.f32 %v334, %v1128
        %v1249 = vadd.f32 %v335, %v1130
        %v1250 = vadd.f32 %v336, %v1133
        %v1251 = vadd.f32 %v337, %v1135
        %v1252 = vadd.f32 %v338, %v1138
        %v1253 = vadd.f32 %v339, %v1140
        %v1254 = vadd.f32 %v340, %v1143
        %v1255 = vadd.f32 %v341, %v1145
        %v1256 = vadd.f32 %v342, %v1148
        %v1257 = vadd.f32 %v343, %v1150
        %v1258 = vadd.f32 %v344, %v1153
        %v1259 = vadd.f32 %v345, %v1155
        %v1260 = vadd.f32 %v346, %v1158
        %v1261 = vadd.f32 %v347, %v1160
        %v1262 = vadd.f32 %v348, %v1163
        %v1263 = vadd.f32 %v349, %v1165
        %v1264 = vadd.f32 %v350, %v1168
        %v1265 = vadd.f32 %v351, %v1170
        %v1266 = vadd.f32 %v352, %v1173
        %v1267 = vadd.f32 %v353, %v1175
        %v1268 = vadd.f32 %v354, %v1178
        %v1269 = vadd.f32 %v355, %v1180
        %v1270 = vadd.f32 %v356, %v1183
        %v1271 = vadd.f32 %v357, %v1185
        %v1272 = vadd.f32 %v358, %v1188
        %v1273 = vadd.f32 %v359, %v1190
        %v1274 = vadd.f32 %v360, %v1193
        %v1275 = vadd.f32 %v361, %v1195
        %v1276 = vadd.f32 %v362, %v1198
        %v1277 = vadd.f32 %v363, %v1200
        %v1278 = vadd.f32 %v364, %v1203
        %v1279 = vadd.f32 %v365, %v1205
        %v1280 = vadd.f32 %v366, %v1208
        %v1281 = vadd.f32 %v367, %v1210
        %v1282 = vadd.f32 %v368, %v1213
        %v1283 = vadd.f32 %v369, %v1215
        %v1284 = vadd.f32 %v370, %v1218
        %v1285 = vadd.f32 %v371, %v1220
        %1286 = vst [vmem:[#allocation2] sm:$0xff] %v1222
        %1287 = vst [vmem:[#allocation2 + $0x8] sm:$0xff] %v1223
        %1288 = vst [vmem:[#allocation2 + $0x10] sm:$0xff] %v1224
        %1289 = vst [vmem:[#allocation2 + $0x18] sm:$0xff] %v1225
        %1290 = vst [vmem:[#allocation2 + $0x20] sm:$0xff] %v1226
        %1291 = vst [vmem:[#allocation2 + $0x28] sm:$0xff] %v1227
        %1292 = vst [vmem:[#allocation2 + $0x30] sm:$0xff] %v1228
        %1293 = vst [vmem:[#allocation2 + $0x38] sm:$0xff] %v1229
        %1294 = vst [vmem:[#allocation2 + $0x40] sm:$0xff] %v1230
        %1295 = vst [vmem:[#allocation2 + $0x48] sm:$0xff] %v1231
        %1296 = vst [vmem:[#allocation2 + $0x50] sm:$0xff] %v1232
        %1297 = vst [vmem:[#allocation2 + $0x58] sm:$0xff] %v1233
        %1298 = vst [vmem:[#allocation2 + $0x60] sm:$0xff] %v1234
        %1299 = vst [vmem:[#allocation2 + $0x68] sm:$0xff] %v1235
        %1300 = vst [vmem:[#allocation2 + $0x70] sm:$0xff] %v1236
        %1301 = vst [vmem:[#allocation2 + $0x78] sm:$0xff] %v1237
        %1302 = vst [vmem:[#allocation2 + $0x80] sm:$0xff] %v1238
        %1303 = vst [vmem:[#allocation2 + $0x88] sm:$0xff] %v1239
        %1304 = vst [vmem:[#allocation2 + $0x90] sm:$0xff] %v1240
        %1305 = vst [vmem:[#allocation2 + $0x98] sm:$0xff] %v1241
        %1306 = vst [vmem:[#allocation2 + $0xa0] sm:$0xff] %v1242
        %1307 = vst [vmem:[#allocation2 + $0xa8] sm:$0xff] %v1243
        %1308 = vst [vmem:[#allocation2 + $0xb0] sm:$0xff] %v1244
        %1309 = vst [vmem:[#allocation2 + $0xb8] sm:$0xff] %v1245
        %1310 = vst [vmem:[#allocation2 + $0xc0] sm:$0xff] %v1246
        %1311 = vst [vmem:[#allocation2 + $0xc8] sm:$0xff] %v1247
        %1312 = vst [vmem:[#allocation2 + $0xd0] sm:$0xff] %v1248
        %1313 = vst [vmem:[#allocation2 + $0xd8] sm:$0xff] %v1249
        %1314 = vst [vmem:[#allocation2 + $0xe0] sm:$0xff] %v1250
        %1315 = vst [vmem:[#allocation2 + $0xe8] sm:$0xff] %v1251
        %1316 = vst [vmem:[#allocation2 + $0xf0] sm:$0xff] %v1252
        %1317 = vst [vmem:[#allocation2 + $0xf8] sm:$0xff] %v1253
        %1318 = vst [vmem:[#allocation2 + $0x100] sm:$0xff] %v1254
        %1319 = vst [vmem:[#allocation2 + $0x108] sm:$0xff] %v1255
        %1320 = vst [vmem:[#allocation2 + $0x110] sm:$0xff] %v1256
        %1321 = vst [vmem:[#allocation2 + $0x118] sm:$0xff] %v1257
        %1322 = vst [vmem:[#allocation2 + $0x120] sm:$0xff] %v1258
        %1323 = vst [vmem:[#allocation2 + $0x128] sm:$0xff] %v1259
        %1324 = vst [vmem:[#allocation2 + $0x130] sm:$0xff] %v1260
        %1325 = vst [vmem:[#allocation2 + $0x138] sm:$0xff] %v1261
        %1326 = vst [vmem:[#allocation2 + $0x140] sm:$0xff] %v1262
        %1327 = vst [vmem:[#allocation2 + $0x148] sm:$0xff] %v1263
        %1328 = vst [vmem:[#allocation2 + $0x150] sm:$0xff] %v1264
        %1329 = vst [vmem:[#allocation2 + $0x158] sm:$0xff] %v1265
        %1330 = vst [vmem:[#allocation2 + $0x160] sm:$0xff] %v1266
        %1331 = vst [vmem:[#allocation2 + $0x168] sm:$0xff] %v1267
        %1332 = vst [vmem:[#allocation2 + $0x170] sm:$0xff] %v1268
        %1333 = vst [vmem:[#allocation2 + $0x178] sm:$0xff] %v1269
        %1334 = vst [vmem:[#allocation2 + $0x180] sm:$0xff] %v1270
        %1335 = vst [vmem:[#allocation2 + $0x188] sm:$0xff] %v1271
        %1336 = vst [vmem:[#allocation2 + $0x190] sm:$0xff] %v1272
        %1337 = vst [vmem:[#allocation2 + $0x198] sm:$0xff] %v1273
        %1338 = vst [vmem:[#allocation2 + $0x1a0] sm:$0xff] %v1274
        %1339 = vst [vmem:[#allocation2 + $0x1a8] sm:$0xff] %v1275
        %1340 = vst [vmem:[#allocation2 + $0x1b0] sm:$0xff] %v1276
        %1341 = vst [vmem:[#allocation2 + $0x1b8] sm:$0xff] %v1277
        %1342 = vst [vmem:[#allocation2 + $0x1c0] sm:$0xff] %v1278
        %1343 = vst [vmem:[#allocation2 + $0x1c8] sm:$0xff] %v1279
        %1344 = vst [vmem:[#allocation2 + $0x1d0] sm:$0xff] %v1280
        %1345 = vst [vmem:[#allocation2 + $0x1d8] sm:$0xff] %v1281
        %1346 = vst [vmem:[#allocation2 + $0x1e0] sm:$0xff] %v1282
        %1347 = vst [vmem:[#allocation2 + $0x1e8] sm:$0xff] %v1283
        %1348 = vst [vmem:[#allocation2 + $0x1f0] sm:$0xff] %v1284
        %1349 = vst [vmem:[#allocation2 + $0x1f8] sm:$0xff] %v1285
        // Predicated region
        $region41: #{tpu_custom_call.1} parent=27 // pred_check
          %p1350 = pneg %p240
        $region42: #{tpu_custom_call.1} parent=27 // pred_check_branch
          %1352 = sbr.rel (%p1350) target = $region44
        $region43: #{tpu_custom_call.1} parent=27 // pred_region
          %v1353 = vld [vmem:[#allocation2] sm:$0xff]
          %v1354 = vld [vmem:[#allocation2 + $0x8] sm:$0xff]
          %v1355 = vld [vmem:[#allocation2 + $0x10] sm:$0xff]
          %v1356 = vld [vmem:[#allocation2 + $0x18] sm:$0xff]
          %v1357 = vld [vmem:[#allocation2 + $0x20] sm:$0xff]
          %v1358 = vld [vmem:[#allocation2 + $0x28] sm:$0xff]
          %v1359 = vld [vmem:[#allocation2 + $0x30] sm:$0xff]
          %v1360 = vld [vmem:[#allocation2 + $0x38] sm:$0xff]
          %v1361 = vld [vmem:[#allocation2 + $0x40] sm:$0xff]
          %v1362 = vld [vmem:[#allocation2 + $0x48] sm:$0xff]
          %v1363 = vld [vmem:[#allocation2 + $0x50] sm:$0xff]
          %v1364 = vld [vmem:[#allocation2 + $0x58] sm:$0xff]
          %v1365 = vld [vmem:[#allocation2 + $0x60] sm:$0xff]
          %v1366 = vld [vmem:[#allocation2 + $0x68] sm:$0xff]
          %v1367 = vld [vmem:[#allocation2 + $0x70] sm:$0xff]
          %v1368 = vld [vmem:[#allocation2 + $0x78] sm:$0xff]
          %v1369 = vld [vmem:[#allocation2 + $0x80] sm:$0xff]
          %v1370 = vld [vmem:[#allocation2 + $0x88] sm:$0xff]
          %v1371 = vld [vmem:[#allocation2 + $0x90] sm:$0xff]
          %v1372 = vld [vmem:[#allocation2 + $0x98] sm:$0xff]
          %v1373 = vld [vmem:[#allocation2 + $0xa0] sm:$0xff]
          %v1374 = vld [vmem:[#allocation2 + $0xa8] sm:$0xff]
          %v1375 = vld [vmem:[#allocation2 + $0xb0] sm:$0xff]
          %v1376 = vld [vmem:[#allocation2 + $0xb8] sm:$0xff]
          %v1377 = vld [vmem:[#allocation2 + $0xc0] sm:$0xff]
          %v1378 = vld [vmem:[#allocation2 + $0xc8] sm:$0xff]
          %v1379 = vld [vmem:[#allocation2 + $0xd0] sm:$0xff]
          %v1380 = vld [vmem:[#allocation2 + $0xd8] sm:$0xff]
          %v1381 = vld [vmem:[#allocation2 + $0xe0] sm:$0xff]
          %v1382 = vld [vmem:[#allocation2 + $0xe8] sm:$0xff]
          %v1383 = vld [vmem:[#allocation2 + $0xf0] sm:$0xff]
          %v1384 = vld [vmem:[#allocation2 + $0xf8] sm:$0xff]
          %v1385 = vld [vmem:[#allocation2 + $0x100] sm:$0xff]
          %v1386 = vld [vmem:[#allocation2 + $0x108] sm:$0xff]
          %v1387 = vld [vmem:[#allocation2 + $0x110] sm:$0xff]
          %v1388 = vld [vmem:[#allocation2 + $0x118] sm:$0xff]
          %v1389 = vld [vmem:[#allocation2 + $0x120] sm:$0xff]
          %v1390 = vld [vmem:[#allocation2 + $0x128] sm:$0xff]
          %v1391 = vld [vmem:[#allocation2 + $0x130] sm:$0xff]
          %v1392 = vld [vmem:[#allocation2 + $0x138] sm:$0xff]
          %v1393 = vld [vmem:[#allocation2 + $0x140] sm:$0xff]
          %v1394 = vld [vmem:[#allocation2 + $0x148] sm:$0xff]
          %v1395 = vld [vmem:[#allocation2 + $0x150] sm:$0xff]
          %v1396 = vld [vmem:[#allocation2 + $0x158] sm:$0xff]
          %v1397 = vld [vmem:[#allocation2 + $0x160] sm:$0xff]
          %v1398 = vld [vmem:[#allocation2 + $0x168] sm:$0xff]
          %v1399 = vld [vmem:[#allocation2 + $0x170] sm:$0xff]
          %v1400 = vld [vmem:[#allocation2 + $0x178] sm:$0xff]
          %v1401 = vld [vmem:[#allocation2 + $0x180] sm:$0xff]
          %v1402 = vld [vmem:[#allocation2 + $0x188] sm:$0xff]
          %v1403 = vld [vmem:[#allocation2 + $0x190] sm:$0xff]
          %v1404 = vld [vmem:[#allocation2 + $0x198] sm:$0xff]
          %v1405 = vld [vmem:[#allocation2 + $0x1a0] sm:$0xff]
          %v1406 = vld [vmem:[#allocation2 + $0x1a8] sm:$0xff]
          %v1407 = vld [vmem:[#allocation2 + $0x1b0] sm:$0xff]
          %v1408 = vld [vmem:[#allocation2 + $0x1b8] sm:$0xff]
          %v1409 = vld [vmem:[#allocation2 + $0x1c0] sm:$0xff]
          %v1410 = vld [vmem:[#allocation2 + $0x1c8] sm:$0xff]
          %v1411 = vld [vmem:[#allocation2 + $0x1d0] sm:$0xff]
          %v1412 = vld [vmem:[#allocation2 + $0x1d8] sm:$0xff]
          %v1413 = vld [vmem:[#allocation2 + $0x1e0] sm:$0xff]
          %v1414 = vld [vmem:[#allocation2 + $0x1e8] sm:$0xff]
          %v1415 = vld [vmem:[#allocation2 + $0x1f0] sm:$0xff]
          %v1416 = vld [vmem:[#allocation2 + $0x1f8] sm:$0xff]
          %v1417 = vpack.c.bf16 %v1353, %v1353
          %v1418 = vpack.c.bf16 %v1354, %v1354
          %v1419 = vpack.c.bf16 %v1355, %v1355
          %v1420 = vpack.c.bf16 %v1356, %v1356
          %v1421 = vpack.c.bf16 %v1357, %v1357
          %v1422 = vpack.c.bf16 %v1358, %v1358
          %v1423 = vpack.c.bf16 %v1359, %v1359
          %v1424 = vpack.c.bf16 %v1360, %v1360
          %v1425 = vpack.c.bf16 %v1361, %v1361
          %v1426 = vpack.c.bf16 %v1362, %v1362
          %v1427 = vpack.c.bf16 %v1363, %v1363
          %v1428 = vpack.c.bf16 %v1364, %v1364
          %v1429 = vpack.c.bf16 %v1365, %v1365
          %v1430 = vpack.c.bf16 %v1366, %v1366
          %v1431 = vpack.c.bf16 %v1367, %v1367
          %v1432 = vpack.c.bf16 %v1368, %v1368
          %v1433 = vpack.c.bf16 %v1369, %v1369
          %v1434 = vpack.c.bf16 %v1370, %v1370
          %v1435 = vpack.c.bf16 %v1371, %v1371
          %v1436 = vpack.c.bf16 %v1372, %v1372
          %v1437 = vpack.c.bf16 %v1373, %v1373
          %v1438 = vpack.c.bf16 %v1374, %v1374
          %v1439 = vpack.c.bf16 %v1375, %v1375
          %v1440 = vpack.c.bf16 %v1376, %v1376
          %v1441 = vpack.c.bf16 %v1377, %v1377
          %v1442 = vpack.c.bf16 %v1378, %v1378
          %v1443 = vpack.c.bf16 %v1379, %v1379
          %v1444 = vpack.c.bf16 %v1380, %v1380
          %v1445 = vpack.c.bf16 %v1381, %v1381
          %v1446 = vpack.c.bf16 %v1382, %v1382
          %v1447 = vpack.c.bf16 %v1383, %v1383
          %v1448 = vpack.c.bf16 %v1384, %v1384
          %v1449 = vpack.c.bf16 %v1385, %v1385
          %v1450 = vpack.c.bf16 %v1386, %v1386
          %v1451 = vpack.c.bf16 %v1387, %v1387
          %v1452 = vpack.c.bf16 %v1388, %v1388
          %v1453 = vpack.c.bf16 %v1389, %v1389
          %v1454 = vpack.c.bf16 %v1390, %v1390
          %v1455 = vpack.c.bf16 %v1391, %v1391
          %v1456 = vpack.c.bf16 %v1392, %v1392
          %v1457 = vpack.c.bf16 %v1393, %v1393
          %v1458 = vpack.c.bf16 %v1394, %v1394
          %v1459 = vpack.c.bf16 %v1395, %v1395
          %v1460 = vpack.c.bf16 %v1396, %v1396
          %v1461 = vpack.c.bf16 %v1397, %v1397
          %v1462 = vpack.c.bf16 %v1398, %v1398
          %v1463 = vpack.c.bf16 %v1399, %v1399
          %v1464 = vpack.c.bf16 %v1400, %v1400
          %v1465 = vpack.c.bf16 %v1401, %v1401
          %v1466 = vpack.c.bf16 %v1402, %v1402
          %v1467 = vpack.c.bf16 %v1403, %v1403
          %v1468 = vpack.c.bf16 %v1404, %v1404
          %v1469 = vpack.c.bf16 %v1405, %v1405
          %v1470 = vpack.c.bf16 %v1406, %v1406
          %v1471 = vpack.c.bf16 %v1407, %v1407
          %v1472 = vpack.c.bf16 %v1408, %v1408
          %v1473 = vpack.c.bf16 %v1409, %v1409
          %v1474 = vpack.c.bf16 %v1410, %v1410
          %v1475 = vpack.c.bf16 %v1411, %v1411
          %v1476 = vpack.c.bf16 %v1412, %v1412
          %v1477 = vpack.c.bf16 %v1413, %v1413
          %v1478 = vpack.c.bf16 %v1414, %v1414
          %v1479 = vpack.c.bf16 %v1415, %v1415
          %v1480 = vpack.c.bf16 %v1416, %v1416
          %1481 = vst [vmem:[%s235] sm:$0xf] %v1417
          %1482 = vst [vmem:[%s235 + $0x4] sm:$0xf] %v1418
          %1483 = vst [vmem:[%s235 + $0x8] sm:$0xf] %v1419
          %1484 = vst [vmem:[%s235 + $0xc] sm:$0xf] %v1420
          %1485 = vst [vmem:[%s235 + $0x10] sm:$0xf] %v1421
          %1486 = vst [vmem:[%s235 + $0x14] sm:$0xf] %v1422
          %1487 = vst [vmem:[%s235 + $0x18] sm:$0xf] %v1423
          %1488 = vst [vmem:[%s235 + $0x1c] sm:$0xf] %v1424
          %1489 = vst [vmem:[%s235 + $0x20] sm:$0xf] %v1425
          %1490 = vst [vmem:[%s235 + $0x24] sm:$0xf] %v1426
          %1491 = vst [vmem:[%s235 + $0x28] sm:$0xf] %v1427
          %1492 = vst [vmem:[%s235 + $0x2c] sm:$0xf] %v1428
          %1493 = vst [vmem:[%s235 + $0x30] sm:$0xf] %v1429
          %1494 = vst [vmem:[%s235 + $0x34] sm:$0xf] %v1430
          %1495 = vst [vmem:[%s235 + $0x38] sm:$0xf] %v1431
          %1496 = vst [vmem:[%s235 + $0x3c] sm:$0xf] %v1432
          %1497 = vst [vmem:[%s235 + $0x40] sm:$0xf] %v1433
          %1498 = vst [vmem:[%s235 + $0x44] sm:$0xf] %v1434
          %1499 = vst [vmem:[%s235 + $0x48] sm:$0xf] %v1435
          %1500 = vst [vmem:[%s235 + $0x4c] sm:$0xf] %v1436
          %1501 = vst [vmem:[%s235 + $0x50] sm:$0xf] %v1437
          %1502 = vst [vmem:[%s235 + $0x54] sm:$0xf] %v1438
          %1503 = vst [vmem:[%s235 + $0x58] sm:$0xf] %v1439
          %1504 = vst [vmem:[%s235 + $0x5c] sm:$0xf] %v1440
          %1505 = vst [vmem:[%s235 + $0x60] sm:$0xf] %v1441
          %1506 = vst [vmem:[%s235 + $0x64] sm:$0xf] %v1442
          %1507 = vst [vmem:[%s235 + $0x68] sm:$0xf] %v1443
          %1508 = vst [vmem:[%s235 + $0x6c] sm:$0xf] %v1444
          %1509 = vst [vmem:[%s235 + $0x70] sm:$0xf] %v1445
          %1510 = vst [vmem:[%s235 + $0x74] sm:$0xf] %v1446
          %1511 = vst [vmem:[%s235 + $0x78] sm:$0xf] %v1447
          %1512 = vst [vmem:[%s235 + $0x7c] sm:$0xf] %v1448
          %1513 = vst [vmem:[%s235 + $0x80] sm:$0xf] %v1449
          %1514 = vst [vmem:[%s235 + $0x84] sm:$0xf] %v1450
          %1515 = vst [vmem:[%s235 + $0x88] sm:$0xf] %v1451
          %1516 = vst [vmem:[%s235 + $0x8c] sm:$0xf] %v1452
          %1517 = vst [vmem:[%s235 + $0x90] sm:$0xf] %v1453
          %1518 = vst [vmem:[%s235 + $0x94] sm:$0xf] %v1454
          %1519 = vst [vmem:[%s235 + $0x98] sm:$0xf] %v1455
          %1520 = vst [vmem:[%s235 + $0x9c] sm:$0xf] %v1456
          %1521 = vst [vmem:[%s235 + $0xa0] sm:$0xf] %v1457
          %1522 = vst [vmem:[%s235 + $0xa4] sm:$0xf] %v1458
          %1523 = vst [vmem:[%s235 + $0xa8] sm:$0xf] %v1459
          %1524 = vst [vmem:[%s235 + $0xac] sm:$0xf] %v1460
          %1525 = vst [vmem:[%s235 + $0xb0] sm:$0xf] %v1461
          %1526 = vst [vmem:[%s235 + $0xb4] sm:$0xf] %v1462
          %1527 = vst [vmem:[%s235 + $0xb8] sm:$0xf] %v1463
          %1528 = vst [vmem:[%s235 + $0xbc] sm:$0xf] %v1464
          %1529 = vst [vmem:[%s235 + $0xc0] sm:$0xf] %v1465
          %1530 = vst [vmem:[%s235 + $0xc4] sm:$0xf] %v1466
          %1531 = vst [vmem:[%s235 + $0xc8] sm:$0xf] %v1467
          %1532 = vst [vmem:[%s235 + $0xcc] sm:$0xf] %v1468
          %1533 = vst [vmem:[%s235 + $0xd0] sm:$0xf] %v1469
          %1534 = vst [vmem:[%s235 + $0xd4] sm:$0xf] %v1470
          %1535 = vst [vmem:[%s235 + $0xd8] sm:$0xf] %v1471
          %1536 = vst [vmem:[%s235 + $0xdc] sm:$0xf] %v1472
          %1537 = vst [vmem:[%s235 + $0xe0] sm:$0xf] %v1473
          %1538 = vst [vmem:[%s235 + $0xe4] sm:$0xf] %v1474
          %1539 = vst [vmem:[%s235 + $0xe8] sm:$0xf] %v1475
          %1540 = vst [vmem:[%s235 + $0xec] sm:$0xf] %v1476
          %1541 = vst [vmem:[%s235 + $0xf0] sm:$0xf] %v1477
          %1542 = vst [vmem:[%s235 + $0xf4] sm:$0xf] %v1478
          %1543 = vst [vmem:[%s235 + $0xf8] sm:$0xf] %v1479
          %1544 = vst [vmem:[%s235 + $0xfc] sm:$0xf] %v1480
        $region44: #{tpu_custom_call.1} parent=27 // pred_fallthru
          _
        %s1545 = sand.u32 %s107, 1
        %s1546 = scalar_lea.sflag [#allocation5], %s1545
        %s1547 = sand.u32 %s107, 1
        %s1548 = smul.addr %s1547, 256
        %s1549 = scalar_lea.vmem [#allocation8], %s1548
        // Predicated region
        $region45: #{tpu_custom_call.1} parent=27 // pred_check
          %p1550 = pneg %p117
        $region46: #{tpu_custom_call.1} parent=27 // pred_check_branch
          %1552 = sbr.rel (%p1550) target = $region48
        $region47: #{tpu_custom_call.1} parent=27 // pred_region
          %s1553 = smul.u32 64, %s27
          %1555 = vsyncadd %s1546, 0
          %s1556 = smul.addr %s1553, 7
          %s1557 = sadd.s32 %s28, %s1556
          %s1558 = smul.addr %s1557, 4
          %s1559 = scalar_lea.hbm %s2, %s1558
          %s1560 = sshll.u32 %s1549, 4
          %s1561 = int_to_ptr.vmem [resolvable:$true] %s1560
          %s1562 = sshll.u32 %s1559, 4
          %s1563 = int_to_ptr.hbm [resolvable:$true] %s1562
          %1568 = dma.vmem_to_hbm [thread:$0]  %s1561, 4096, %s1563, %s1546, 64, 448, 4
        $region48: #{tpu_custom_call.1} parent=27 // pred_fallthru
          _
      $region28: #{tpu_custom_call.1} parent=5 // pred_fallthru
        _
      %p1569 = scmp.le.s32.totalorder 2, %s17
      // Predicated region
      $region49: #{tpu_custom_call.1} parent=5 // pred_check
        %p1570 = pneg %p1569
      $region50: #{tpu_custom_call.1} parent=5 // pred_check_branch
        %1572 = sbr.rel (%p1570) target = $region52
      $region51: #{tpu_custom_call.1} parent=5 // pred_region
        %s1573 = ssub.s32 %s17, 2
        // Predicated region
        $region53: #{tpu_custom_call.1} parent=51 // pred_check
          %p1574 = pneg %p123
        $region54: #{tpu_custom_call.1} parent=51 // pred_check_branch
          %1576 = sbr.rel (%p1574) target = $region56
        $region55: #{tpu_custom_call.1} parent=51 // pred_region
          %s1577 = sand.u32 %s108, 1
          %s1578 = scalar_lea.sflag [#allocation5], %s1577
          %s1579 = sand.u32 %s108, 1
          %s1580 = smul.addr %s1579, 256
          %s1581 = scalar_lea.vmem [#allocation8], %s1580
          %1583 = dma.done %s1578, 4096
        $region56: #{tpu_custom_call.1} parent=51 // pred_fallthru
          _
      $region52: #{tpu_custom_call.1} parent=5 // pred_fallthru
        _
    $region6: #{tpu_custom_call.1} parent=1 // loop_footer
      %s21 = sadd.s32 1, %s17
    $region7: #{tpu_custom_call.1} parent=1 // loop_footer_branch
      %16 = sbr.rel target = $region3
    $region8: #{tpu_custom_call.1} parent=1 // loop_exit
      _
    %1584 = vsyncpa [#allocation4], 1
    %s1585 = scalar_lea.sflag [#allocation4], 1
    %1586 = vsyncpa %s1585, 1
    %1587 = vsyncpa [#allocation7], 1
    %s1588 = scalar_lea.sflag [#allocation7], 1
    %1589 = vsyncpa %s1588, 1
    %1590 = vsyncpa [#allocation5], 1
    %s1591 = scalar_lea.sflag [#allocation5], 1
    %1592 = vsyncpa %s1591, 1

</llo_original>
